<compile_context>
chip_gen: v7x
topology: tpu7x:2x2x1
jax: 0.10.0
libtpu: 0.0.40
codegen_flags: <defaults>
</compile_context>

<pallas_src>
import functools

import jax
import jax.numpy as jnp
from jax.experimental import pallas as pl
from jax.experimental.pallas import tpu as pltpu


_VMEM_LIMIT = 32 * 1024 * 1024  # fits v7x (64 MiB VMEM) with headroom


def _round_up(x, m):
    return ((x + m - 1) // m) * m


def _pick_tile(dim, candidates):
    for c in candidates:
        if dim % c == 0:
            return c
    return dim


# --------------------------------------------------------------------------
# Pallas kernel bodies
# --------------------------------------------------------------------------
def _gemm_kernel(a_ref, b_ref, scale_ref, bias_ref, o_ref, acc_ref, *, relu):
    """Tiled GEMM: f32 VMEM accumulator over the K grid axis, fused epilogue."""
    k = pl.program_id(2)

    @pl.when(k == 0)
    def _():
        acc_ref[...] = jnp.zeros_like(acc_ref)

    acc_ref[...] += jnp.dot(a_ref[...], b_ref[...],
                            preferred_element_type=jnp.float32)

    @pl.when(k == pl.num_programs(2) - 1)
    def _():
        y = acc_ref[...] * scale_ref[...] + bias_ref[...]
        if relu:
            y = jnp.maximum(y, 0.0)
        o_ref[...] = y.astype(o_ref.dtype)


def _conv_tap_kernel(x_ref, w_ref, scale_ref, bias_ref, *rest,
                     kh, kw, stride, wo, cin, relu, has_res):
    """Direct convolution for one output row and one Cout tile.

    x_ref : (1, HB, S, WB, S*Cin)  parity-reshaped, padded NHWC input (bf16)
    w_ref : (kh*kw, Cin, tn)       tap-major weights (bf16)
    out   : (1, 1, Wo, tn)         bf16
    Accumulates kh*kw shifted GEMMs in f32; BN scale/bias, residual add and
    ReLU are applied once in the epilogue.
    """
    if has_res:
        res_ref, o_ref = rest
    else:
        (o_ref,) = rest
        res_ref = None

    h = pl.program_id(2)
    tn = o_ref.shape[3]
    acc = jnp.zeros((wo, tn), jnp.float32)
    for di in range(kh):
        a_h, p_h = di // stride, di % stride
        for dj in range(kw):
            a_w, p_w = dj // stride, dj % stride
            a = x_ref[0, h + a_h, p_h, pl.ds(a_w, wo), pl.ds(p_w * cin, cin)]
            acc = acc + jnp.dot(a, w_ref[di * kw + dj],
                                preferred_element_type=jnp.float32)
    y = acc * scale_ref[...] + bias_ref[...]
    if has_res:
        y = y + res_ref[0, 0].astype(jnp.float32)
    if relu:
        y = jnp.maximum(y, 0.0)
    o_ref[0, 0] = y.astype(o_ref.dtype)


def _maxpool_kernel(x_ref, o_ref, *, ho, wo, c):
    """3x3/2 max-pool: 9 unit-stride taps of the parity-reshaped padded input."""
    m = None
    for di in range(3):
        a_h, p_h = di // 2, di % 2
        for dj in range(3):
            a_w, p_w = dj // 2, dj % 2
            t = x_ref[0, pl.ds(a_h, ho), p_h, pl.ds(a_w, wo), pl.ds(p_w * c, c)]
            m = t if m is None else jnp.maximum(m, t)
    o_ref[0] = m


def _avgpool_kernel(x_ref, o_ref, *, inv_hw):
    s = jnp.sum(x_ref[0].astype(jnp.float32), axis=0, keepdims=True)
    o_ref[...] = s * inv_hw


# --------------------------------------------------------------------------
# Pallas wrappers
# --------------------------------------------------------------------------
def fused_gemm(a, b, scale, bias, *, relu, out_dtype):
    """out = act((a @ b) * scale + bias).  a:[M,K] bf16, b:[K,N] bf16 (aligned)."""
    M, K = a.shape
    _, N = b.shape
    scale2 = scale.reshape(1, N).astype(jnp.float32)
    bias2 = bias.reshape(1, N).astype(jnp.float32)
    tm = _pick_tile(M, (512, 256, 128, 64, 32, 16, 8))
    tn = _pick_tile(N, (256, 128))
    tk = _pick_tile(K, (512, 256, 128))
    grid = (M // tm, N // tn, K // tk)
    kernel = functools.partial(_gemm_kernel, relu=relu)
    return pl.pallas_call(
        kernel,
        out_shape=jax.ShapeDtypeStruct((M, N), out_dtype),
        grid=grid,
        in_specs=[
            pl.BlockSpec((tm, tk), lambda i, j, k: (i, k)),
            pl.BlockSpec((tk, tn), lambda i, j, k: (k, j)),
            pl.BlockSpec((1, tn), lambda i, j, k: (0, j)),
            pl.BlockSpec((1, tn), lambda i, j, k: (0, j)),
        ],
        out_specs=pl.BlockSpec((tm, tn), lambda i, j, k: (i, j)),
        scratch_shapes=[pltpu.VMEM((tm, tn), jnp.float32)],
        compiler_params=pltpu.CompilerParams(
            dimension_semantics=("parallel", "parallel", "arbitrary"),
            vmem_limit_bytes=_VMEM_LIMIT),
    )(a, b, scale2, bias2)


@functools.partial(jax.jit, static_argnames=("stride", "pad", "relu"))
def conv_bn(x, w, scale, bias, residual=None, *, stride, pad, relu):
    """Fused direct conv + folded-BN (+ residual) + optional ReLU.

    x: [N,H,W,Cin] NHWC; w: [KH,KW,Cin,Cout]; residual: [N,Ho,Wo,Cout] or None.
    No im2col: the kernel accumulates KH*KW shifted GEMMs from a parity-reshaped
    padded input that is DMA'd to VMEM once per image.
    """
    kh, kw, cin, cout = w.shape
    n, hh, ww, _ = x.shape
    ho = (hh + 2 * pad - kh) // stride + 1
    wo = (ww + 2 * pad - kw) // stride + 1
    if pad:
        x = jnp.pad(x, ((0, 0), (pad, pad), (pad, pad), (0, 0)))
    hp, wp = hh + 2 * pad, ww + 2 * pad
    assert hp % stride == 0 and wp % stride == 0
    hb, wb = hp // stride, wp // stride
    # Free bitcast reshape: row parity -> dim 2, column parity folded into lanes.
    xr = x.astype(jnp.bfloat16).reshape(n, hb, stride, wb, stride * cin)
    wr = w.reshape(kh * kw, cin, cout).astype(jnp.bfloat16)
    scale2 = scale.reshape(1, cout).astype(jnp.float32)
    bias2 = bias.reshape(1, cout).astype(jnp.float32)

    tn = cout if cout < 128 else 128  # lane-dense output tiles for Cout >= 128
    n_ct = cout // tn
    has_res = residual is not None

    in_specs = [
        pl.BlockSpec((1, hb, stride, wb, stride * cin),
                     lambda b, ct, h: (b, 0, 0, 0, 0)),
        pl.BlockSpec((kh * kw, cin, tn), lambda b, ct, h: (0, 0, ct)),
        pl.BlockSpec((1, tn), lambda b, ct, h: (0, ct)),
        pl.BlockSpec((1, tn), lambda b, ct, h: (0, ct)),
    ]
    args = [xr, wr, scale2, bias2]
    if has_res:
        in_specs.append(
            pl.BlockSpec((1, 1, wo, tn), lambda b, ct, h: (b, h, 0, ct)))
        args.append(residual.astype(jnp.bfloat16))

    kernel = functools.partial(_conv_tap_kernel, kh=kh, kw=kw, stride=stride,
                               wo=wo, cin=cin, relu=relu, has_res=has_res)
    return pl.pallas_call(
        kernel,
        out_shape=jax.ShapeDtypeStruct((n, ho, wo, cout), jnp.bfloat16),
        grid=(n, n_ct, ho),
        in_specs=in_specs,
        out_specs=pl.BlockSpec((1, 1, wo, tn), lambda b, ct, h: (b, h, 0, ct)),
        compiler_params=pltpu.CompilerParams(
            dimension_semantics=("parallel", "parallel", "arbitrary"),
            vmem_limit_bytes=_VMEM_LIMIT),
    )(*args)


def _im2col(x, kh, kw, stride, pad):
    # Stem only (Cin=3).  K ordered as (kh, kw, cin).
    if pad > 0:
        x = jnp.pad(x, ((0, 0), (pad, pad), (pad, pad), (0, 0)))
    n, hh, ww, c = x.shape
    ho = (hh - kh) // stride + 1
    wo = (ww - kw) // stride + 1
    cols = []
    for i in range(kh):
        for j in range(kw):
            cols.append(x[:, i:i + stride * ho:stride, j:j + stride * wo:stride, :])
    patches = jnp.stack(cols, axis=3)  # [N, Ho, Wo, kh*kw, C]
    return patches.reshape(n * ho * wo, kh * kw * c), (n, ho, wo)


@jax.jit
def stem_conv(x, w, scale, bias):
    """7x7/2 stem conv (Cin=3) via im2col + tiled GEMM; K padded 147 -> 256."""
    kh, kw, cin, cout = w.shape
    patches, (n, ho, wo) = _im2col(x, kh, kw, stride=2, pad=3)
    m, k = patches.shape
    kp = _round_up(k, 128)
    mp = _round_up(m, 256) if m >= 256 else _round_up(m, 8)
    a = jnp.pad(patches, ((0, mp - m), (0, kp - k))).astype(jnp.bfloat16)
    wm = jnp.pad(w.reshape(k, cout), ((0, kp - k), (0, 0))).astype(jnp.bfloat16)
    out = fused_gemm(a, wm, scale, bias, relu=True, out_dtype=jnp.bfloat16)
    return out[:m].reshape(n, ho, wo, cout)


@jax.jit
def maxpool_3x3_s2_p1(x):
    n, hh, ww, c = x.shape
    ho, wo = hh // 2, ww // 2
    xp = jnp.pad(x, ((0, 0), (1, 1), (1, 1), (0, 0)),
                 constant_values=-jnp.inf)
    hb, wb = (hh + 2) // 2, (ww + 2) // 2
    xr = xp.reshape(n, hb, 2, wb, 2 * c)  # free parity reshape
    kernel = functools.partial(_maxpool_kernel, ho=ho, wo=wo, c=c)
    return pl.pallas_call(
        kernel,
        out_shape=jax.ShapeDtypeStruct((n, ho, wo, c), x.dtype),
        grid=(n,),
        in_specs=[pl.BlockSpec((1, hb, 2, wb, 2 * c),
                               lambda b: (b, 0, 0, 0, 0))],
        out_specs=pl.BlockSpec((1, ho, wo, c), lambda b: (b, 0, 0, 0)),
        compiler_params=pltpu.CompilerParams(
            dimension_semantics=("parallel",),
            vmem_limit_bytes=_VMEM_LIMIT),
    )(xr)


@jax.jit
def global_avg_pool(x):
    n, hh, ww, c = x.shape
    xr = x.reshape(n, hh * ww, c)
    kernel = functools.partial(_avgpool_kernel, inv_hw=1.0 / float(hh * ww))
    return pl.pallas_call(
        kernel,
        out_shape=jax.ShapeDtypeStruct((n, c), jnp.float32),
        grid=(n,),
        in_specs=[pl.BlockSpec((1, hh * ww, c), lambda b: (b, 0, 0))],
        out_specs=pl.BlockSpec((1, c), lambda b: (b, 0)),
        compiler_params=pltpu.CompilerParams(
            dimension_semantics=("parallel",),
            vmem_limit_bytes=_VMEM_LIMIT),
    )(xr)


@jax.jit
def fused_heads(feat, w1, b1, w2, b2, w3, b3):
    """All three Linear heads in one lane-dense GEMM (N = 168+11+7 -> 256)."""
    n1, n2, n3 = w1.shape[1], w2.shape[1], w3.shape[1]
    ntot = n1 + n2 + n3
    npad = _round_up(ntot, 128)
    w = jnp.pad(jnp.concatenate([w1, w2, w3], axis=1),
                ((0, 0), (0, npad - ntot)))
    bb = jnp.pad(jnp.concatenate([b1, b2, b3]), (0, npad - ntot))
    bsz = feat.shape[0]
    mp = _round_up(bsz, 8)
    a = jnp.pad(feat, ((0, mp - bsz), (0, 0))).astype(jnp.bfloat16)
    ones = jnp.ones((npad,), jnp.float32)
    out = fused_gemm(a, w.astype(jnp.bfloat16), ones, bb,
                     relu=False, out_dtype=jnp.float32)[:bsz]
    return out[:, :n1], out[:, n1:n1 + n2], out[:, n1 + n2:ntot]


# --------------------------------------------------------------------------
# Deterministic synthetic parameters (ResNet34 shapes)
# --------------------------------------------------------------------------
def _init_conv(key, cout, cin, kh, kw):
    fan_in = kh * kw * cin
    return jax.random.normal(key, (kh, kw, cin, cout), jnp.float32) / jnp.sqrt(fan_in)


def _init_bn(key, c, eps=1e-5):
    k1, k2, k3, k4 = jax.random.split(key, 4)
    gamma = 1.0 + 0.1 * jax.random.normal(k1, (c,), jnp.float32)
    beta = 0.1 * jax.random.normal(k2, (c,), jnp.float32)
    mean = 0.1 * jax.random.normal(k3, (c,), jnp.float32)
    var = jnp.abs(1.0 + 0.1 * jax.random.normal(k4, (c,), jnp.float32))
    scale = gamma / jnp.sqrt(var + eps)
    bias = beta - mean * scale
    return scale, bias


def _init_fc(key, out_d, in_d=512):
    k1, k2 = jax.random.split(key)
    w = jax.random.normal(k1, (in_d, out_d), jnp.float32) / jnp.sqrt(in_d)
    b = 0.01 * jax.random.normal(k2, (out_d,), jnp.float32)
    return w, b


def init_params(key):
    keys = iter(jax.random.split(key, 256))
    params = {}
    params["conv1_w"] = _init_conv(next(keys), 64, 3, 7, 7)
    params["conv1_bn"] = _init_bn(next(keys), 64)
    stages = [(64, 3, 1), (128, 4, 2), (256, 6, 2), (512, 3, 2)]
    in_c = 64
    blocks = []
    for (c, n, s) in stages:
        for b in range(n):
            stride = s if b == 0 else 1
            blk = {"stride": stride}
            blk["conv1_w"] = _init_conv(next(keys), c, in_c, 3, 3)
            blk["bn1"] = _init_bn(next(keys), c)
            blk["conv2_w"] = _init_conv(next(keys), c, c, 3, 3)
            blk["bn2"] = _init_bn(next(keys), c)
            if stride != 1 or in_c != c:
                blk["down_w"] = _init_conv(next(keys), c, in_c, 1, 1)
                blk["down_bn"] = _init_bn(next(keys), c)
            blocks.append(blk)
            in_c = c
    params["blocks"] = blocks
    params["fc1"] = _init_fc(next(keys), 168)
    params["fc2"] = _init_fc(next(keys), 11)
    params["fc3"] = _init_fc(next(keys), 7)
    return params


# --------------------------------------------------------------------------
# Forward pass (matches ResNet34.forward)
# --------------------------------------------------------------------------
def resnet34_forward(params, x_nchw):
    x = jnp.transpose(x_nchw, (0, 2, 3, 1)).astype(jnp.float32)  # NCHW -> NHWC

    s, b = params["conv1_bn"]
    x = stem_conv(x, params["conv1_w"], s, b)      # [N, H/2, W/2, 64] bf16
    x = maxpool_3x3_s2_p1(x)                       # [N, H/4, W/4, 64]

    for blk in params["blocks"]:
        stride = blk["stride"]
        identity = x
        s1, b1 = blk["bn1"]
        out = conv_bn(x, blk["conv1_w"], s1, b1,
                      stride=stride, pad=1, relu=True)
        if "down_w" in blk:
            ds_, db = blk["down_bn"]
            identity = conv_bn(x, blk["down_w"], ds_, db,
                               stride=stride, pad=0, relu=False)
        s2, b2 = blk["bn2"]
        # conv2: BN + residual add + final ReLU fused into the conv epilogue
        x = conv_bn(out, blk["conv2_w"], s2, b2, residual=identity,
                    stride=1, pad=1, relu=True)

    feat = global_avg_pool(x)                      # [N, 512] f32
    w1, bb1 = params["fc1"]
    w2, bb2 = params["fc2"]
    w3, bb3 = params["fc3"]
    return fused_heads(feat, w1, bb1, w2, bb2, w3, bb3)


if __name__ == "__main__":
    key = jax.random.PRNGKey(0)
    pkey, xkey = jax.random.split(key)
    params = init_params(pkey)
    # small deterministic input: batch=2, RGB, 64x64 (final feature map 2x2x512)
    x = jax.random.normal(xkey, (2, 3, 64, 64), jnp.float32)

    y1, y2, y3 = resnet34_forward(params, x)
    jax.block_until_ready((y1, y2, y3))

    assert y1.shape == (2, 168), y1.shape
    assert y2.shape == (2, 11), y2.shape
    assert y3.shape == (2, 7), y3.shape
    assert jnp.all(jnp.isfinite(y1)) and jnp.all(jnp.isfinite(y2)) and jnp.all(jnp.isfinite(y3))
    print("KERNEL_OK")
</pallas_src>

<mosaic_0001>
module attributes {stable_mosaic.version = 11 : i64} {
  func.func @_gemm_kernel(%arg0: i32, %arg1: i32, %arg2: i32, %arg3: memref<512x256xbf16, #tpu.memory_space<vmem>>, %arg4: memref<256x64xbf16, #tpu.memory_space<vmem>>, %arg5: memref<1x64xf32, #tpu.memory_space<vmem>>, %arg6: memref<1x64xf32, #tpu.memory_space<vmem>>, %arg7: memref<512x64xbf16, #tpu.memory_space<vmem>>, %arg8: memref<512x64xf32, #tpu.memory_space<vmem>>) attributes {dimension_semantics = [#tpu.dimension_semantics<parallel>, #tpu.dimension_semantics<parallel>, #tpu.dimension_semantics<arbitrary>], iteration_bounds = array<i64: 4, 1, 1>, scalar_prefetch = 0 : i64, scratch_operands = 1 : i64, tpu.core_type = #tpu.core_type<tc>, window_params = [{transform_indices = @transform_0, window_bounds = array<i64: 512, 256>}, {transform_indices = @transform_1, window_bounds = array<i64: 256, 64>}, {transform_indices = @transform_2, window_bounds = array<i64: 1, 64>}, {transform_indices = @transform_3, window_bounds = array<i64: 1, 64>}, {transform_indices = @transform_4, window_bounds = array<i64: 512, 64>}]} {
    %c0_i32 = arith.constant 0 : i32
    %0 = arith.cmpi eq, %arg2, %c0_i32 : i32
    %1 = arith.extui %0 : i1 to i32
    %c0_i32_0 = arith.constant 0 : i32
    %2 = arith.cmpi ne, %1, %c0_i32_0 : i32
    scf.if %2 {
      %cst_10 = arith.constant 0.000000e+00 : f32
      %12 = vector.broadcast %cst_10 : f32 to vector<512x64xf32>
      %c0_11 = arith.constant 0 : index
      %c0_12 = arith.constant 0 : index
      %13 = vector.load %arg8[%c0_11, %c0_12] : memref<512x64xf32, #tpu.memory_space<vmem>>, vector<512x64xf32>
      tpu.vector_store %arg8[%c0_11, %c0_12], %12 {strides = array<i32>} : memref<512x64xf32, #tpu.memory_space<vmem>>, vector<512x64xf32>,
    } else {
    }
    %c0 = arith.constant 0 : index
    %c0_1 = arith.constant 0 : index
    %3 = vector.load %arg8[%c0, %c0_1] : memref<512x64xf32, #tpu.memory_space<vmem>>, vector<512x64xf32>
    %c0_2 = arith.constant 0 : index
    %c0_3 = arith.constant 0 : index
    %4 = vector.load %arg3[%c0_2, %c0_3] : memref<512x256xbf16, #tpu.memory_space<vmem>>, vector<512x256xbf16>
    %c0_4 = arith.constant 0 : index
    %c0_5 = arith.constant 0 : index
    %5 = vector.load %arg4[%c0_4, %c0_5] : memref<256x64xbf16, #tpu.memory_space<vmem>>, vector<256x64xbf16>
    %cst = arith.constant dense<0.000000e+00> : vector<512x64xf32>
    %6 = tpu.matmul %4, %5, %cst {dimension_numbers = #tpu.dot_dimension_numbers<[1], [0], [0], [1], [0, 0, 1, 1], [], []>} : vector<512x256xbf16>, vector<256x64xbf16>, vector<512x64xf32> -> vector<512x64xf32>
    %7 = arith.addf %3, %6 : vector<512x64xf32>
    %c0_6 = arith.constant 0 : index
    %c0_7 = arith.constant 0 : index
    %8 = vector.load %arg8[%c0_6, %c0_7] : memref<512x64xf32, #tpu.memory_space<vmem>>, vector<512x64xf32>
    tpu.vector_store %arg8[%c0_6, %c0_7], %7 {strides = array<i32>} : memref<512x64xf32, #tpu.memory_space<vmem>>, vector<512x64xf32>,
    %c0_i32_8 = arith.constant 0 : i32
    %9 = arith.cmpi eq, %arg2, %c0_i32_8 : i32
    %10 = arith.extui %9 : i1 to i32
    %c0_i32_9 = arith.constant 0 : i32
    %11 = arith.cmpi ne, %10, %c0_i32_9 : i32
    scf.if %11 {
      %c0_10 = arith.constant 0 : index
      %c0_11 = arith.constant 0 : index
      %12 = vector.load %arg8[%c0_10, %c0_11] : memref<512x64xf32, #tpu.memory_space<vmem>>, vector<512x64xf32>
      %c0_12 = arith.constant 0 : index
      %c0_13 = arith.constant 0 : index
      %13 = vector.load %arg5[%c0_12, %c0_13] : memref<1x64xf32, #tpu.memory_space<vmem>>, vector<1x64xf32>
      %14 = vector.broadcast %13 : vector<1x64xf32> to vector<512x64xf32>
      %15 = arith.mulf %12, %14 : vector<512x64xf32>
      %c0_14 = arith.constant 0 : index
      %c0_15 = arith.constant 0 : index
      %16 = vector.load %arg6[%c0_14, %c0_15] : memref<1x64xf32, #tpu.memory_space<vmem>>, vector<1x64xf32>
      %17 = vector.broadcast %16 : vector<1x64xf32> to vector<512x64xf32>
      %18 = arith.addf %15, %17 : vector<512x64xf32>
      %cst_16 = arith.constant 0.000000e+00 : f32
      %19 = vector.broadcast %cst_16 : f32 to vector<512x64xf32>
      %20 = arith.maximumf %18, %19 : vector<512x64xf32>
      %21 = arith.truncf %20 : vector<512x64xf32> to vector<512x64xbf16>
      %c0_17 = arith.constant 0 : index
      %c0_18 = arith.constant 0 : index
      %22 = vector.load %arg7[%c0_17, %c0_18] : memref<512x64xbf16, #tpu.memory_space<vmem>>, vector<512x64xbf16>
      tpu.vector_store %arg7[%c0_17, %c0_18], %21 {strides = array<i32>} : memref<512x64xbf16, #tpu.memory_space<vmem>>, vector<512x64xbf16>,
    } else {
    }
    return
  }
  func.func @transform_0(%arg0: i32, %arg1: i32, %arg2: i32) -> (i32, i32) {
    %c0_i32 = arith.constant 0 : i32
    return %arg0, %arg2 : i32, i32
  }
  func.func @transform_1(%arg0: i32, %arg1: i32, %arg2: i32) -> (i32, i32) {
    %c0_i32 = arith.constant 0 : i32
    return %arg2, %arg1 : i32, i32
  }
  func.func @transform_2(%arg0: i32, %arg1: i32, %arg2: i32) -> (i32, i32) {
    %c0_i32 = arith.constant 0 : i32
    %c0_i32_0 = arith.constant 0 : i32
    return %c0_i32, %arg1 : i32, i32
  }
  func.func @transform_3(%arg0: i32, %arg1: i32, %arg2: i32) -> (i32, i32) {
    %c0_i32 = arith.constant 0 : i32
    %c0_i32_0 = arith.constant 0 : i32
    return %c0_i32, %arg1 : i32, i32
  }
  func.func @transform_4(%arg0: i32, %arg1: i32, %arg2: i32) -> (i32, i32) {
    %c0_i32 = arith.constant 0 : i32
    return %arg0, %arg1 : i32, i32
  }
}

</mosaic_0001>

<llo_original>
// kernel: stem_conv.1
$region0: #{stem_conv.1}
  #allocation0 [shape = 'u32[]', space=smem, size = 0x4, offset = 0x4, fixed_abs, tag = 'smem constant byte address 0x4 - core index']
  #allocation1 [shape = 'u32[144,128]{1,0:T(1,128)}', space=vmem, size = 0x12000, scoped, tag = 'internal scratch']
  #allocation2 [shape = 'f32[512,64]{1,0:T(8,128)}', space=vmem, size = 0x40000, scoped, tag = 'scratch operand']
  %s0 = inlined_call_operand.vmem [shape: bf16[2048,256], index: 0, kind: input, shape index: {}]
  %s1 = inlined_call_operand.vmem [shape: bf16[256,64], index: 1, kind: input, shape index: {}]
  %s2 = inlined_call_operand.vmem [shape: f32[1,64], index: 2, kind: input, shape index: {}]
  %s3 = inlined_call_operand.vmem [shape: f32[1,64], index: 3, kind: input, shape index: {}]
  %s4 = inlined_call_operand.hbm [shape: bf16[2048,64], index: 4, kind: output, shape index: {}]
  %s5 = sld [smem:[#allocation0]]
  $region57: #{stem_conv.1} parent=0
    _
  %s7 = ssub.s32 1, %s5
  %s8 = scalar_select 0, %s7, %s5
  $region1: #{stem_conv.1} parent=0
    #allocation3 [shape = 'u8[262144]{0}', space=vmem, size = 0x40000, scoped, tag = 'output window, operand 0']
    #allocation4 [shape = 's32[2]{0}', space=sflag, size = 0x8, scoped, tag = 'scoped memory for stem_conv.1']
    %9 = vsyncpa [#allocation4], 0
    %s10 = scalar_lea.sflag [#allocation4], 1
    %11 = vsyncpa %s10, 0
    loop: start=0, step=1, limit=6
    $region2: #{stem_conv.1} parent=1 // loop_pre_header
      _
    $region3: #{stem_conv.1} parent=1 // loop_header
      %s13 = sphi 0, %s17
      %p14 = scmp.ge.s32.totalorder %s13, 6
      %s20 = sphi 0, %s39
      %s21 = sphi 0, %s35
      %s22 = sphi 0, %s31
      %s23 = sphi 0, %s20
      %s24 = sphi 0, %s21
      %s25 = sphi 0, %s22
      %s26 = sphi 0, %s23
      %s27 = sphi 0, %s24
      %s28 = sphi 0, %s25
      %s44 = sphi 0, %s46
      %s47 = sphi 0, %s44
      %s48 = sphi 0, %s47
      %s64 = sphi 0, %s48
      %s72 = sphi 0, %s74
      %s75 = sphi 0, %s72
      %s76 = sphi 0, %s75
      %s92 = sphi 0, %s76
      %s98 = sphi 0, %s100
      %s101 = sphi 0, %s98
      %s102 = sphi 0, %s101
      %s118 = sphi 0, %s102
      %s124 = sphi 0, %s126
      %s127 = sphi 0, %s124
      %s128 = sphi 0, %s127
      %s144 = sphi 0, %s128
      %s152 = sphi 0, %s154
      %s155 = sphi 0, %s152
      %s156 = sphi 0, %s155
      %s172 = sphi 0, %s156
    $region4: #{stem_conv.1} parent=1 // loop_header_branch
      %16 = sbr.rel (%p14) target = $region8
    $region5: #{stem_conv.1} parent=1 // loop_body
      %s18 = ssub.s32 %s13, 1
      %s19 = ssub.s32 %s13, 2
      %s29 = sadd.s32 1, %s22
      %p30 = scmp.ge.s32.totalorder %s29, 1
      %s31 = scalar_select %p30, 0, %s29
      %s32 = sadd.s32 1, %s21
      %s33 = scalar_select %p30, %s32, %s21
      %p34 = scmp.ge.s32.totalorder %s33, 1
      %s35 = scalar_select %p34, 0, %s33
      %s36 = sadd.s32 1, %s20
      %s37 = scalar_select %p34, %s36, %s20
      %p38 = scmp.ge.s32.totalorder %s37, 4
      %s39 = scalar_select %p38, 0, %s37
      %s40 = ssub.s32 %s20, %s39
      %s41 = ssub.s32 %s22, %s31
      %s42 = sor.u32 %s40, %s41
      %p43 = scmp.eq.s32.totalorder %s42, 0
      %s45 = sadd.s32 %s44, 1
      %s46 = scalar_select %p43, %s44, %s45
      %p49 = pneg %p43
      %p50 = scmp.eq.s32.totalorder %s13, 3
      %p51 = por %p49, %p50
      %p52 = scmp.ne.s32.totalorder %s44, %s47
      %p53 = scmp.eq.s32.totalorder %s13, 0
      %p54 = por %p52, %p53
      %p55 = scmp.ne.s32.totalorder %s44, %s47
      %p56 = scmp.eq.s32.totalorder %s18, 3
      %p57 = por %p55, %p56
      %p58 = scmp.ne.s32.totalorder %s47, %s48
      %p59 = scmp.eq.s32.totalorder %s18, 0
      %p60 = por %p58, %p59
      %p61 = scmp.ne.s32.totalorder %s47, %s48
      %p62 = scmp.eq.s32.totalorder %s19, 3
      %p63 = por %p61, %p62
      %p65 = scmp.ne.s32.totalorder %s48, %s64
      %p66 = scmp.eq.s32.totalorder %s19, 0
      %p67 = por %p65, %p66
      %s68 = ssub.s32 %s22, %s31
      %s69 = ssub.s32 %s21, %s35
      %s70 = sor.u32 %s68, %s69
      %p71 = scmp.eq.s32.totalorder %s70, 0
      %s73 = sadd.s32 %s72, 1
      %s74 = scalar_select %p71, %s72, %s73
      %p77 = pneg %p71
      %p78 = scmp.eq.s32.totalorder %s13, 3
      %p79 = por %p77, %p78
      %p80 = scmp.ne.s32.totalorder %s72, %s75
      %p81 = scmp.eq.s32.totalorder %s13, 0
      %p82 = por %p80, %p81
      %p83 = scmp.ne.s32.totalorder %s72, %s75
      %p84 = scmp.eq.s32.totalorder %s18, 3
      %p85 = por %p83, %p84
      %p86 = scmp.ne.s32.totalorder %s75, %s76
      %p87 = scmp.eq.s32.totalorder %s18, 0
      %p88 = por %p86, %p87
      %p89 = scmp.ne.s32.totalorder %s75, %s76
      %p90 = scmp.eq.s32.totalorder %s19, 3
      %p91 = por %p89, %p90
      %p93 = scmp.ne.s32.totalorder %s76, %s92
      %p94 = scmp.eq.s32.totalorder %s19, 0
      %p95 = por %p93, %p94
      %s96 = ssub.s32 %s21, %s35
      %p97 = scmp.eq.s32.totalorder %s96, 0
      %s99 = sadd.s32 %s98, 1
      %s100 = scalar_select %p97, %s98, %s99
      %p103 = pneg %p97
      %p104 = scmp.eq.s32.totalorder %s13, 3
      %p105 = por %p103, %p104
      %p106 = scmp.ne.s32.totalorder %s98, %s101
      %p107 = scmp.eq.s32.totalorder %s13, 0
      %p108 = por %p106, %p107
      %p109 = scmp.ne.s32.totalorder %s98, %s101
      %p110 = scmp.eq.s32.totalorder %s18, 3
      %p111 = por %p109, %p110
      %p112 = scmp.ne.s32.totalorder %s101, %s102
      %p113 = scmp.eq.s32.totalorder %s18, 0
      %p114 = por %p112, %p113
      %p115 = scmp.ne.s32.totalorder %s101, %s102
      %p116 = scmp.eq.s32.totalorder %s19, 3
      %p117 = por %p115, %p116
      %p119 = scmp.ne.s32.totalorder %s102, %s118
      %p120 = scmp.eq.s32.totalorder %s19, 0
      %p121 = por %p119, %p120
      %s122 = ssub.s32 %s21, %s35
      %p123 = scmp.eq.s32.totalorder %s122, 0
      %s125 = sadd.s32 %s124, 1
      %s126 = scalar_select %p123, %s124, %s125
      %p129 = pneg %p123
      %p130 = scmp.eq.s32.totalorder %s13, 3
      %p131 = por %p129, %p130
      %p132 = scmp.ne.s32.totalorder %s124, %s127
      %p133 = scmp.eq.s32.totalorder %s13, 0
      %p134 = por %p132, %p133
      %p135 = scmp.ne.s32.totalorder %s124, %s127
      %p136 = scmp.eq.s32.totalorder %s18, 3
      %p137 = por %p135, %p136
      %p138 = scmp.ne.s32.totalorder %s127, %s128
      %p139 = scmp.eq.s32.totalorder %s18, 0
      %p140 = por %p138, %p139
      %p141 = scmp.ne.s32.totalorder %s127, %s128
      %p142 = scmp.eq.s32.totalorder %s19, 3
      %p143 = por %p141, %p142
      %p145 = scmp.ne.s32.totalorder %s128, %s144
      %p146 = scmp.eq.s32.totalorder %s19, 0
      %p147 = por %p145, %p146
      %s148 = ssub.s32 %s20, %s39
      %s149 = ssub.s32 %s21, %s35
      %s150 = sor.u32 %s148, %s149
      %p151 = scmp.eq.s32.totalorder %s150, 0
      %s153 = sadd.s32 %s152, 1
      %s154 = scalar_select %p151, %s152, %s153
      %p157 = pneg %p151
      %p158 = scmp.eq.s32.totalorder %s13, 3
      %p159 = por %p157, %p158
      %p160 = scmp.ne.s32.totalorder %s152, %s155
      %p161 = scmp.eq.s32.totalorder %s13, 0
      %p162 = por %p160, %p161
      %p163 = scmp.ne.s32.totalorder %s152, %s155
      %p164 = scmp.eq.s32.totalorder %s18, 3
      %p165 = por %p163, %p164
      %p166 = scmp.ne.s32.totalorder %s155, %s156
      %p167 = scmp.eq.s32.totalorder %s18, 0
      %p168 = por %p166, %p167
      %p169 = scmp.ne.s32.totalorder %s155, %s156
      %p170 = scmp.eq.s32.totalorder %s19, 3
      %p171 = por %p169, %p170
      %p173 = scmp.ne.s32.totalorder %s156, %s172
      %p174 = scmp.eq.s32.totalorder %s19, 0
      %p175 = por %p173, %p174
      %p176 = scmp.le.s32.totalorder 1, %s13
      %p177 = scmp.lt.s32.totalorder %s13, 5
      %p178 = pnand %p176, %p177
      %p179 = pneg %p178
      // Predicated region
      $region9: #{stem_conv.1} parent=5 // pred_check
        _
      $region10: #{stem_conv.1} parent=5 // pred_check_branch
        %181 = sbr.rel (%p178) target = $region12
      $region11: #{stem_conv.1} parent=5 // pred_region
        %s182 = ssub.s32 %s13, 1
        // Predicated region
        $region13: #{stem_conv.1} parent=11 // pred_check
          %p183 = pneg %p88
        $region14: #{stem_conv.1} parent=11 // pred_check_branch
          %185 = sbr.rel (%p183) target = $region16
        $region15: #{stem_conv.1} parent=11 // pred_region
          %s186 = smul.u32 32, %s25
          %p187 = scmp.lt.s32.totalorder %s186, 31
          %s188 = scalar_select %p187, %s186, 31
          %p189 = scmp.lt.s32.totalorder %s24, 0
          %s190 = scalar_select %p189, %s24, 0
          %s191 = sadd.s32 %s190, %s188
          %s192 = smul.addr %s191, 4
          %s193 = scalar_lea.vmem %s1, %s192
          %s194 = smul.u32 32, %s25
        $region16: #{stem_conv.1} parent=11 // pred_fallthru
          _
        // Predicated region
        $region17: #{stem_conv.1} parent=11 // pred_check
          %p195 = pneg %p114
        $region18: #{stem_conv.1} parent=11 // pred_check_branch
          %197 = sbr.rel (%p195) target = $region20
        $region19: #{stem_conv.1} parent=11 // pred_region
          %p198 = scmp.lt.s32.totalorder %s24, 0
          %s199 = scalar_select %p198, %s24, 0
          %s200 = scalar_lea.vmem %s2, %s199
        $region20: #{stem_conv.1} parent=11 // pred_fallthru
          _
        // Predicated region
        $region21: #{stem_conv.1} parent=11 // pred_check
          %p201 = pneg %p140
        $region22: #{stem_conv.1} parent=11 // pred_check_branch
          %203 = sbr.rel (%p201) target = $region24
        $region23: #{stem_conv.1} parent=11 // pred_region
          %p204 = scmp.lt.s32.totalorder %s24, 0
          %s205 = scalar_select %p204, %s24, 0
          %s206 = scalar_lea.vmem %s3, %s205
        $region24: #{stem_conv.1} parent=11 // pred_fallthru
          _
      $region12: #{stem_conv.1} parent=5 // pred_fallthru
        _
      %p207 = scmp.lt.s32.totalorder %s13, 4
      // Predicated region
      $region25: #{stem_conv.1} parent=5 // pred_check
        %p208 = pneg %p207
      $region26: #{stem_conv.1} parent=5 // pred_check_branch
        %210 = sbr.rel (%p208) target = $region28
      $region27: #{stem_conv.1} parent=5 // pred_region
        // Predicated region
        $region29: #{stem_conv.1} parent=27 // pred_check
          %p211 = pneg %p54
        $region30: #{stem_conv.1} parent=27 // pred_check_branch
          %213 = sbr.rel (%p211) target = $region32
        $region31: #{stem_conv.1} parent=27 // pred_region
          %s214 = smul.u32 64, %s20
          %s215 = smul.u32 2, %s22
          %p216 = scmp.lt.s32.totalorder %s214, 255
          %s217 = scalar_select %p216, %s214, 255
          %p218 = scmp.lt.s32.totalorder %s215, 1
          %s219 = scalar_select %p218, %s215, 1
          %s220 = smul.addr %s217, 2
          %s221 = sadd.s32 %s219, %s220
          %s222 = smul.addr %s221, 4
          %s223 = scalar_lea.vmem %s0, %s222
          %s224 = smul.u32 64, %s20
          %s225 = smul.u32 2, %s22
        $region32: #{stem_conv.1} parent=27 // pred_fallthru
          _
      $region28: #{stem_conv.1} parent=5 // pred_fallthru
        _
      %p226 = scmp.le.s32.totalorder 1, %s13
      %p227 = scmp.lt.s32.totalorder %s13, 5
      %p228 = pnand %p226, %p227
      %p229 = pneg %p228
      // Predicated region
      $region33: #{stem_conv.1} parent=5 // pred_check
        _
      $region34: #{stem_conv.1} parent=5 // pred_check_branch
        %231 = sbr.rel (%p228) target = $region36
      $region35: #{stem_conv.1} parent=5 // pred_region
        %s232 = ssub.s32 %s13, 1
        %s233 = smul.u32 64, %s23
        %s234 = smul.u32 2, %s25
        %p235 = scmp.lt.s32.totalorder %s233, 255
        %s236 = scalar_select %p235, %s233, 255
        %p237 = scmp.lt.s32.totalorder %s234, 1
        %s238 = scalar_select %p237, %s234, 1
        %s239 = smul.addr %s236, 2
        %s240 = sadd.s32 %s238, %s239
        %s241 = smul.addr %s240, 4
        %s242 = scalar_lea.vmem %s0, %s241
        %p243 = pneg %p60
        %p244 = pneg %p57
        %s245 = smul.u32 32, %s25
        %p246 = scmp.lt.s32.totalorder %s245, 31
        %s247 = scalar_select %p246, %s245, 31
        %p248 = scmp.lt.s32.totalorder %s24, 0
        %s249 = scalar_select %p248, %s24, 0
        %s250 = sadd.s32 %s249, %s247
        %s251 = smul.addr %s250, 4
        %s252 = scalar_lea.vmem %s1, %s251
        %p253 = pneg %p88
        %p254 = pneg %p85
        %p255 = scmp.lt.s32.totalorder %s24, 0
        %s256 = scalar_select %p255, %s24, 0
        %s257 = scalar_lea.vmem %s2, %s256
        %p258 = pneg %p114
        %p259 = pneg %p111
        %p260 = scmp.lt.s32.totalorder %s24, 0
        %s261 = scalar_select %p260, %s24, 0
        %s262 = scalar_lea.vmem %s3, %s261
        %p263 = pneg %p140
        %p264 = pneg %p137
        %p265 = pneg %p168
        %p266 = pneg %p165
        %s267 = sand.u32 %s155, 1
        %s268 = scalar_lea.sflag [#allocation4], %s267
        %s269 = sand.u32 %s155, 1
        %s270 = smul.addr %s269, 256
        %s271 = scalar_lea.vmem [#allocation3], %s270
        %s272 = smul.u32 64, %s23
        %s273 = smul.u32 2, %s25
        %p274 = scmp.lt.s32.totalorder %s272, 255
        %s275 = scalar_select %p274, %s272, 255
        %p276 = scmp.lt.s32.totalorder %s273, 1
        %s277 = scalar_select %p276, %s273, 1
        %s278 = smul.addr %s275, 2
        %s279 = sadd.s32 %s277, %s278
        %s280 = smul.addr %s279, 4
        %s281 = scalar_lea.vmem %s0, %s280
        %s282 = smul.u32 64, %s23
        %s283 = smul.u32 2, %s25
        %s284 = smul.u32 32, %s25
        %p285 = scmp.lt.s32.totalorder %s284, 31
        %s286 = scalar_select %p285, %s284, 31
        %p287 = scmp.lt.s32.totalorder %s24, 0
        %s288 = scalar_select %p287, %s24, 0
        %s289 = sadd.s32 %s288, %s286
        %s290 = smul.addr %s289, 4
        %s291 = scalar_lea.vmem %s1, %s290
        %s292 = smul.u32 32, %s25
        %p293 = scmp.lt.s32.totalorder %s24, 0
        %s294 = scalar_select %p293, %s24, 0
        %s295 = scalar_lea.vmem %s2, %s294
        %p296 = scmp.lt.s32.totalorder %s24, 0
        %s297 = scalar_select %p296, %s24, 0
        %s298 = scalar_lea.vmem %s3, %s297
        %s299 = smul.u32 64, %s23
        %p301 = scmp.eq.s32.totalorder %s25, 0
        // Predicated region
        $region37: #{stem_conv.1} parent=35 // pred_check
          %p302 = pneg %p301
        $region38: #{stem_conv.1} parent=35 // pred_check_branch
          %304 = sbr.rel (%p302) target = $region40
        $region39: #{stem_conv.1} parent=35 // pred_region
          %vm305 = vcmask 523264
          %306 = vst.msk [vmem:[#allocation2] sm:$0xff] %vm305, 0.0
          %307 = vst.msk [vmem:[#allocation2 + $0x8] sm:$0xff] %vm305, 0.0
          %308 = vst.msk [vmem:[#allocation2 + $0x10] sm:$0xff] %vm305, 0.0
          %309 = vst.msk [vmem:[#allocation2 + $0x18] sm:$0xff] %vm305, 0.0
          %310 = vst.msk [vmem:[#allocation2 + $0x20] sm:$0xff] %vm305, 0.0
          %311 = vst.msk [vmem:[#allocation2 + $0x28] sm:$0xff] %vm305, 0.0
          %312 = vst.msk [vmem:[#allocation2 + $0x30] sm:$0xff] %vm305, 0.0
          %313 = vst.msk [vmem:[#allocation2 + $0x38] sm:$0xff] %vm305, 0.0
          %314 = vst.msk [vmem:[#allocation2 + $0x40] sm:$0xff] %vm305, 0.0
          %315 = vst.msk [vmem:[#allocation2 + $0x48] sm:$0xff] %vm305, 0.0
          %316 = vst.msk [vmem:[#allocation2 + $0x50] sm:$0xff] %vm305, 0.0
          %317 = vst.msk [vmem:[#allocation2 + $0x58] sm:$0xff] %vm305, 0.0
          %318 = vst.msk [vmem:[#allocation2 + $0x60] sm:$0xff] %vm305, 0.0
          %319 = vst.msk [vmem:[#allocation2 + $0x68] sm:$0xff] %vm305, 0.0
          %320 = vst.msk [vmem:[#allocation2 + $0x70] sm:$0xff] %vm305, 0.0
          %321 = vst.msk [vmem:[#allocation2 + $0x78] sm:$0xff] %vm305, 0.0
          %322 = vst.msk [vmem:[#allocation2 + $0x80] sm:$0xff] %vm305, 0.0
          %323 = vst.msk [vmem:[#allocation2 + $0x88] sm:$0xff] %vm305, 0.0
          %324 = vst.msk [vmem:[#allocation2 + $0x90] sm:$0xff] %vm305, 0.0
          %325 = vst.msk [vmem:[#allocation2 + $0x98] sm:$0xff] %vm305, 0.0
          %326 = vst.msk [vmem:[#allocation2 + $0xa0] sm:$0xff] %vm305, 0.0
          %327 = vst.msk [vmem:[#allocation2 + $0xa8] sm:$0xff] %vm305, 0.0
          %328 = vst.msk [vmem:[#allocation2 + $0xb0] sm:$0xff] %vm305, 0.0
          %329 = vst.msk [vmem:[#allocation2 + $0xb8] sm:$0xff] %vm305, 0.0
          %330 = vst.msk [vmem:[#allocation2 + $0xc0] sm:$0xff] %vm305, 0.0
          %331 = vst.msk [vmem:[#allocation2 + $0xc8] sm:$0xff] %vm305, 0.0
          %332 = vst.msk [vmem:[#allocation2 + $0xd0] sm:$0xff] %vm305, 0.0
          %333 = vst.msk [vmem:[#allocation2 + $0xd8] sm:$0xff] %vm305, 0.0
          %334 = vst.msk [vmem:[#allocation2 + $0xe0] sm:$0xff] %vm305, 0.0
          %335 = vst.msk [vmem:[#allocation2 + $0xe8] sm:$0xff] %vm305, 0.0
          %336 = vst.msk [vmem:[#allocation2 + $0xf0] sm:$0xff] %vm305, 0.0
          %337 = vst.msk [vmem:[#allocation2 + $0xf8] sm:$0xff] %vm305, 0.0
          %338 = vst.msk [vmem:[#allocation2 + $0x100] sm:$0xff] %vm305, 0.0
          %339 = vst.msk [vmem:[#allocation2 + $0x108] sm:$0xff] %vm305, 0.0
          %340 = vst.msk [vmem:[#allocation2 + $0x110] sm:$0xff] %vm305, 0.0
          %341 = vst.msk [vmem:[#allocation2 + $0x118] sm:$0xff] %vm305, 0.0
          %342 = vst.msk [vmem:[#allocation2 + $0x120] sm:$0xff] %vm305, 0.0
          %343 = vst.msk [vmem:[#allocation2 + $0x128] sm:$0xff] %vm305, 0.0
          %344 = vst.msk [vmem:[#allocation2 + $0x130] sm:$0xff] %vm305, 0.0
          %345 = vst.msk [vmem:[#allocation2 + $0x138] sm:$0xff] %vm305, 0.0
          %346 = vst.msk [vmem:[#allocation2 + $0x140] sm:$0xff] %vm305, 0.0
          %347 = vst.msk [vmem:[#allocation2 + $0x148] sm:$0xff] %vm305, 0.0
          %348 = vst.msk [vmem:[#allocation2 + $0x150] sm:$0xff] %vm305, 0.0
          %349 = vst.msk [vmem:[#allocation2 + $0x158] sm:$0xff] %vm305, 0.0
          %350 = vst.msk [vmem:[#allocation2 + $0x160] sm:$0xff] %vm305, 0.0
          %351 = vst.msk [vmem:[#allocation2 + $0x168] sm:$0xff] %vm305, 0.0
          %352 = vst.msk [vmem:[#allocation2 + $0x170] sm:$0xff] %vm305, 0.0
          %353 = vst.msk [vmem:[#allocation2 + $0x178] sm:$0xff] %vm305, 0.0
          %354 = vst.msk [vmem:[#allocation2 + $0x180] sm:$0xff] %vm305, 0.0
          %355 = vst.msk [vmem:[#allocation2 + $0x188] sm:$0xff] %vm305, 0.0
          %356 = vst.msk [vmem:[#allocation2 + $0x190] sm:$0xff] %vm305, 0.0
          %357 = vst.msk [vmem:[#allocation2 + $0x198] sm:$0xff] %vm305, 0.0
          %358 = vst.msk [vmem:[#allocation2 + $0x1a0] sm:$0xff] %vm305, 0.0
          %359 = vst.msk [vmem:[#allocation2 + $0x1a8] sm:$0xff] %vm305, 0.0
          %360 = vst.msk [vmem:[#allocation2 + $0x1b0] sm:$0xff] %vm305, 0.0
          %361 = vst.msk [vmem:[#allocation2 + $0x1b8] sm:$0xff] %vm305, 0.0
          %362 = vst.msk [vmem:[#allocation2 + $0x1c0] sm:$0xff] %vm305, 0.0
          %363 = vst.msk [vmem:[#allocation2 + $0x1c8] sm:$0xff] %vm305, 0.0
          %364 = vst.msk [vmem:[#allocation2 + $0x1d0] sm:$0xff] %vm305, 0.0
          %365 = vst.msk [vmem:[#allocation2 + $0x1d8] sm:$0xff] %vm305, 0.0
          %366 = vst.msk [vmem:[#allocation2 + $0x1e0] sm:$0xff] %vm305, 0.0
          %367 = vst.msk [vmem:[#allocation2 + $0x1e8] sm:$0xff] %vm305, 0.0
          %368 = vst.msk [vmem:[#allocation2 + $0x1f0] sm:$0xff] %vm305, 0.0
          %369 = vst.msk [vmem:[#allocation2 + $0x1f8] sm:$0xff] %vm305, 0.0
        $region40: #{stem_conv.1} parent=35 // pred_fallthru
          _
        %v370 = vld [vmem:[#allocation2] sm:$0xff]
        %v371 = vld [vmem:[#allocation2 + $0x8] sm:$0xff]
        %v372 = vld [vmem:[#allocation2 + $0x10] sm:$0xff]
        %v373 = vld [vmem:[#allocation2 + $0x18] sm:$0xff]
        %v374 = vld [vmem:[#allocation2 + $0x20] sm:$0xff]
        %v375 = vld [vmem:[#allocation2 + $0x28] sm:$0xff]
        %v376 = vld [vmem:[#allocation2 + $0x30] sm:$0xff]
        %v377 = vld [vmem:[#allocation2 + $0x38] sm:$0xff]
        %v378 = vld [vmem:[#allocation2 + $0x40] sm:$0xff]
        %v379 = vld [vmem:[#allocation2 + $0x48] sm:$0xff]
        %v380 = vld [vmem:[#allocation2 + $0x50] sm:$0xff]
        %v381 = vld [vmem:[#allocation2 + $0x58] sm:$0xff]
        %v382 = vld [vmem:[#allocation2 + $0x60] sm:$0xff]
        %v383 = vld [vmem:[#allocation2 + $0x68] sm:$0xff]
        %v384 = vld [vmem:[#allocation2 + $0x70] sm:$0xff]
        %v385 = vld [vmem:[#allocation2 + $0x78] sm:$0xff]
        %v386 = vld [vmem:[#allocation2 + $0x80] sm:$0xff]
        %v387 = vld [vmem:[#allocation2 + $0x88] sm:$0xff]
        %v388 = vld [vmem:[#allocation2 + $0x90] sm:$0xff]
        %v389 = vld [vmem:[#allocation2 + $0x98] sm:$0xff]
        %v390 = vld [vmem:[#allocation2 + $0xa0] sm:$0xff]
        %v391 = vld [vmem:[#allocation2 + $0xa8] sm:$0xff]
        %v392 = vld [vmem:[#allocation2 + $0xb0] sm:$0xff]
        %v393 = vld [vmem:[#allocation2 + $0xb8] sm:$0xff]
        %v394 = vld [vmem:[#allocation2 + $0xc0] sm:$0xff]
        %v395 = vld [vmem:[#allocation2 + $0xc8] sm:$0xff]
        %v396 = vld [vmem:[#allocation2 + $0xd0] sm:$0xff]
        %v397 = vld [vmem:[#allocation2 + $0xd8] sm:$0xff]
        %v398 = vld [vmem:[#allocation2 + $0xe0] sm:$0xff]
        %v399 = vld [vmem:[#allocation2 + $0xe8] sm:$0xff]
        %v400 = vld [vmem:[#allocation2 + $0xf0] sm:$0xff]
        %v401 = vld [vmem:[#allocation2 + $0xf8] sm:$0xff]
        %v402 = vld [vmem:[#allocation2 + $0x100] sm:$0xff]
        %v403 = vld [vmem:[#allocation2 + $0x108] sm:$0xff]
        %v404 = vld [vmem:[#allocation2 + $0x110] sm:$0xff]
        %v405 = vld [vmem:[#allocation2 + $0x118] sm:$0xff]
        %v406 = vld [vmem:[#allocation2 + $0x120] sm:$0xff]
        %v407 = vld [vmem:[#allocation2 + $0x128] sm:$0xff]
        %v408 = vld [vmem:[#allocation2 + $0x130] sm:$0xff]
        %v409 = vld [vmem:[#allocation2 + $0x138] sm:$0xff]
        %v410 = vld [vmem:[#allocation2 + $0x140] sm:$0xff]
        %v411 = vld [vmem:[#allocation2 + $0x148] sm:$0xff]
        %v412 = vld [vmem:[#allocation2 + $0x150] sm:$0xff]
        %v413 = vld [vmem:[#allocation2 + $0x158] sm:$0xff]
        %v414 = vld [vmem:[#allocation2 + $0x160] sm:$0xff]
        %v415 = vld [vmem:[#allocation2 + $0x168] sm:$0xff]
        %v416 = vld [vmem:[#allocation2 + $0x170] sm:$0xff]
        %v417 = vld [vmem:[#allocation2 + $0x178] sm:$0xff]
        %v418 = vld [vmem:[#allocation2 + $0x180] sm:$0xff]
        %v419 = vld [vmem:[#allocation2 + $0x188] sm:$0xff]
        %v420 = vld [vmem:[#allocation2 + $0x190] sm:$0xff]
        %v421 = vld [vmem:[#allocation2 + $0x198] sm:$0xff]
        %v422 = vld [vmem:[#allocation2 + $0x1a0] sm:$0xff]
        %v423 = vld [vmem:[#allocation2 + $0x1a8] sm:$0xff]
        %v424 = vld [vmem:[#allocation2 + $0x1b0] sm:$0xff]
        %v425 = vld [vmem:[#allocation2 + $0x1b8] sm:$0xff]
        %v426 = vld [vmem:[#allocation2 + $0x1c0] sm:$0xff]
        %v427 = vld [vmem:[#allocation2 + $0x1c8] sm:$0xff]
        %v428 = vld [vmem:[#allocation2 + $0x1d0] sm:$0xff]
        %v429 = vld [vmem:[#allocation2 + $0x1d8] sm:$0xff]
        %v430 = vld [vmem:[#allocation2 + $0x1e0] sm:$0xff]
        %v431 = vld [vmem:[#allocation2 + $0x1e8] sm:$0xff]
        %v432 = vld [vmem:[#allocation2 + $0x1f0] sm:$0xff]
        %v433 = vld [vmem:[#allocation2 + $0x1f8] sm:$0xff]
        %v434 = vld [vmem:[%s281] sm:$0xff]
        %v435 = vld [vmem:[%s281 + $0x8] sm:$0xff]
        %v436 = vld [vmem:[%s281 + $0x10] sm:$0xff]
        %v437 = vld [vmem:[%s281 + $0x18] sm:$0xff]
        %v438 = vld [vmem:[%s281 + $0x20] sm:$0xff]
        %v439 = vld [vmem:[%s281 + $0x28] sm:$0xff]
        %v440 = vld [vmem:[%s281 + $0x30] sm:$0xff]
        %v441 = vld [vmem:[%s281 + $0x38] sm:$0xff]
        %v442 = vld [vmem:[%s281 + $0x40] sm:$0xff]
        %v443 = vld [vmem:[%s281 + $0x48] sm:$0xff]
        %v444 = vld [vmem:[%s281 + $0x50] sm:$0xff]
        %v445 = vld [vmem:[%s281 + $0x58] sm:$0xff]
        %v446 = vld [vmem:[%s281 + $0x60] sm:$0xff]
        %v447 = vld [vmem:[%s281 + $0x68] sm:$0xff]
        %v448 = vld [vmem:[%s281 + $0x70] sm:$0xff]
        %v449 = vld [vmem:[%s281 + $0x78] sm:$0xff]
        %v450 = vld [vmem:[%s281 + $0x80] sm:$0xff]
        %v451 = vld [vmem:[%s281 + $0x88] sm:$0xff]
        %v452 = vld [vmem:[%s281 + $0x90] sm:$0xff]
        %v453 = vld [vmem:[%s281 + $0x98] sm:$0xff]
        %v454 = vld [vmem:[%s281 + $0xa0] sm:$0xff]
        %v455 = vld [vmem:[%s281 + $0xa8] sm:$0xff]
        %v456 = vld [vmem:[%s281 + $0xb0] sm:$0xff]
        %v457 = vld [vmem:[%s281 + $0xb8] sm:$0xff]
        %v458 = vld [vmem:[%s281 + $0xc0] sm:$0xff]
        %v459 = vld [vmem:[%s281 + $0xc8] sm:$0xff]
        %v460 = vld [vmem:[%s281 + $0xd0] sm:$0xff]
        %v461 = vld [vmem:[%s281 + $0xd8] sm:$0xff]
        %v462 = vld [vmem:[%s281 + $0xe0] sm:$0xff]
        %v463 = vld [vmem:[%s281 + $0xe8] sm:$0xff]
        %v464 = vld [vmem:[%s281 + $0xf0] sm:$0xff]
        %v465 = vld [vmem:[%s281 + $0xf8] sm:$0xff]
        %v466 = vld [vmem:[%s281 + $0x100] sm:$0xff]
        %v467 = vld [vmem:[%s281 + $0x108] sm:$0xff]
        %v468 = vld [vmem:[%s281 + $0x110] sm:$0xff]
        %v469 = vld [vmem:[%s281 + $0x118] sm:$0xff]
        %v470 = vld [vmem:[%s281 + $0x120] sm:$0xff]
        %v471 = vld [vmem:[%s281 + $0x128] sm:$0xff]
        %v472 = vld [vmem:[%s281 + $0x130] sm:$0xff]
        %v473 = vld [vmem:[%s281 + $0x138] sm:$0xff]
        %v474 = vld [vmem:[%s281 + $0x140] sm:$0xff]
        %v475 = vld [vmem:[%s281 + $0x148] sm:$0xff]
        %v476 = vld [vmem:[%s281 + $0x150] sm:$0xff]
        %v477 = vld [vmem:[%s281 + $0x158] sm:$0xff]
        %v478 = vld [vmem:[%s281 + $0x160] sm:$0xff]
        %v479 = vld [vmem:[%s281 + $0x168] sm:$0xff]
        %v480 = vld [vmem:[%s281 + $0x170] sm:$0xff]
        %v481 = vld [vmem:[%s281 + $0x178] sm:$0xff]
        %v482 = vld [vmem:[%s281 + $0x180] sm:$0xff]
        %v483 = vld [vmem:[%s281 + $0x188] sm:$0xff]
        %v484 = vld [vmem:[%s281 + $0x190] sm:$0xff]
        %v485 = vld [vmem:[%s281 + $0x198] sm:$0xff]
        %v486 = vld [vmem:[%s281 + $0x1a0] sm:$0xff]
        %v487 = vld [vmem:[%s281 + $0x1a8] sm:$0xff]
        %v488 = vld [vmem:[%s281 + $0x1b0] sm:$0xff]
        %v489 = vld [vmem:[%s281 + $0x1b8] sm:$0xff]
        %v490 = vld [vmem:[%s281 + $0x1c0] sm:$0xff]
        %v491 = vld [vmem:[%s281 + $0x1c8] sm:$0xff]
        %v492 = vld [vmem:[%s281 + $0x1d0] sm:$0xff]
        %v493 = vld [vmem:[%s281 + $0x1d8] sm:$0xff]
        %v494 = vld [vmem:[%s281 + $0x1e0] sm:$0xff]
        %v495 = vld [vmem:[%s281 + $0x1e8] sm:$0xff]
        %v496 = vld [vmem:[%s281 + $0x1f0] sm:$0xff]
        %v497 = vld [vmem:[%s281 + $0x1f8] sm:$0xff]
        %v498 = vld [vmem:[%s291] sm:$0xf]
        %v499 = vld [vmem:[%s291 + $0x4] sm:$0xf]
        %v500 = vld [vmem:[%s291 + $0x8] sm:$0xf]
        %v501 = vld [vmem:[%s291 + $0xc] sm:$0xf]
        %v502 = vld [vmem:[%s291 + $0x10] sm:$0xf]
        %v503 = vld [vmem:[%s291 + $0x14] sm:$0xf]
        %v504 = vld [vmem:[%s291 + $0x18] sm:$0xf]
        %v505 = vld [vmem:[%s291 + $0x1c] sm:$0xf]
        %v506 = vld [vmem:[%s291 + $0x20] sm:$0xf]
        %v507 = vld [vmem:[%s291 + $0x24] sm:$0xf]
        %v508 = vld [vmem:[%s291 + $0x28] sm:$0xf]
        %v509 = vld [vmem:[%s291 + $0x2c] sm:$0xf]
        %v510 = vld [vmem:[%s291 + $0x30] sm:$0xf]
        %v511 = vld [vmem:[%s291 + $0x34] sm:$0xf]
        %v512 = vld [vmem:[%s291 + $0x38] sm:$0xf]
        %v513 = vld [vmem:[%s291 + $0x3c] sm:$0xf]
        %v514 = vld [vmem:[%s291 + $0x40] sm:$0xf]
        %v515 = vld [vmem:[%s291 + $0x44] sm:$0xf]
        %v516 = vld [vmem:[%s291 + $0x48] sm:$0xf]
        %v517 = vld [vmem:[%s291 + $0x4c] sm:$0xf]
        %v518 = vld [vmem:[%s291 + $0x50] sm:$0xf]
        %v519 = vld [vmem:[%s291 + $0x54] sm:$0xf]
        %v520 = vld [vmem:[%s291 + $0x58] sm:$0xf]
        %v521 = vld [vmem:[%s291 + $0x5c] sm:$0xf]
        %v522 = vld [vmem:[%s291 + $0x60] sm:$0xf]
        %v523 = vld [vmem:[%s291 + $0x64] sm:$0xf]
        %v524 = vld [vmem:[%s291 + $0x68] sm:$0xf]
        %v525 = vld [vmem:[%s291 + $0x6c] sm:$0xf]
        %v526 = vld [vmem:[%s291 + $0x70] sm:$0xf]
        %v527 = vld [vmem:[%s291 + $0x74] sm:$0xf]
        %v528 = vld [vmem:[%s291 + $0x78] sm:$0xf]
        %v529 = vld [vmem:[%s291 + $0x7c] sm:$0xf]
        %v594 = vunpack.c.l.b16 %v434
        %v595 = vunpack.c.h.b16 %v434
        %v596 = vunpack.c.l.b16 %v435
        %v597 = vunpack.c.h.b16 %v435
        %v598 = vunpack.c.l.b16 %v436
        %v599 = vunpack.c.h.b16 %v436
        %v600 = vunpack.c.l.b16 %v437
        %v601 = vunpack.c.h.b16 %v437
        %v602 = vunpack.c.l.b16 %v438
        %v603 = vunpack.c.h.b16 %v438
        %v604 = vunpack.c.l.b16 %v439
        %v605 = vunpack.c.h.b16 %v439
        %v606 = vunpack.c.l.b16 %v440
        %v607 = vunpack.c.h.b16 %v440
        %v608 = vunpack.c.l.b16 %v441
        %v609 = vunpack.c.h.b16 %v441
        %v610 = vunpack.c.l.b16 %v442
        %v611 = vunpack.c.h.b16 %v442
        %v612 = vunpack.c.l.b16 %v443
        %v613 = vunpack.c.h.b16 %v443
        %v614 = vunpack.c.l.b16 %v444
        %v615 = vunpack.c.h.b16 %v444
        %v616 = vunpack.c.l.b16 %v445
        %v617 = vunpack.c.h.b16 %v445
        %v618 = vunpack.c.l.b16 %v446
        %v619 = vunpack.c.h.b16 %v446
        %v620 = vunpack.c.l.b16 %v447
        %v621 = vunpack.c.h.b16 %v447
        %v622 = vunpack.c.l.b16 %v448
        %v623 = vunpack.c.h.b16 %v448
        %v624 = vunpack.c.l.b16 %v449
        %v625 = vunpack.c.h.b16 %v449
        %v626 = vunpack.c.l.b16 %v450
        %v627 = vunpack.c.h.b16 %v450
        %v628 = vunpack.c.l.b16 %v451
        %v629 = vunpack.c.h.b16 %v451
        %v630 = vunpack.c.l.b16 %v452
        %v631 = vunpack.c.h.b16 %v452
        %v632 = vunpack.c.l.b16 %v453
        %v633 = vunpack.c.h.b16 %v453
        %v634 = vunpack.c.l.b16 %v454
        %v635 = vunpack.c.h.b16 %v454
        %v636 = vunpack.c.l.b16 %v455
        %v637 = vunpack.c.h.b16 %v455
        %v638 = vunpack.c.l.b16 %v456
        %v639 = vunpack.c.h.b16 %v456
        %v640 = vunpack.c.l.b16 %v457
        %v641 = vunpack.c.h.b16 %v457
        %v642 = vunpack.c.l.b16 %v458
        %v643 = vunpack.c.h.b16 %v458
        %v644 = vunpack.c.l.b16 %v459
        %v645 = vunpack.c.h.b16 %v459
        %v646 = vunpack.c.l.b16 %v460
        %v647 = vunpack.c.h.b16 %v460
        %v648 = vunpack.c.l.b16 %v461
        %v649 = vunpack.c.h.b16 %v461
        %v650 = vunpack.c.l.b16 %v462
        %v651 = vunpack.c.h.b16 %v462
        %v652 = vunpack.c.l.b16 %v463
        %v653 = vunpack.c.h.b16 %v463
        %v654 = vunpack.c.l.b16 %v464
        %v655 = vunpack.c.h.b16 %v464
        %v656 = vunpack.c.l.b16 %v465
        %v657 = vunpack.c.h.b16 %v465
        %v658 = vunpack.c.l.b16 %v466
        %v659 = vunpack.c.h.b16 %v466
        %v660 = vunpack.c.l.b16 %v467
        %v661 = vunpack.c.h.b16 %v467
        %v662 = vunpack.c.l.b16 %v468
        %v663 = vunpack.c.h.b16 %v468
        %v664 = vunpack.c.l.b16 %v469
        %v665 = vunpack.c.h.b16 %v469
        %v666 = vunpack.c.l.b16 %v470
        %v667 = vunpack.c.h.b16 %v470
        %v668 = vunpack.c.l.b16 %v471
        %v669 = vunpack.c.h.b16 %v471
        %v670 = vunpack.c.l.b16 %v472
        %v671 = vunpack.c.h.b16 %v472
        %v672 = vunpack.c.l.b16 %v473
        %v673 = vunpack.c.h.b16 %v473
        %v674 = vunpack.c.l.b16 %v474
        %v675 = vunpack.c.h.b16 %v474
        %v676 = vunpack.c.l.b16 %v475
        %v677 = vunpack.c.h.b16 %v475
        %v678 = vunpack.c.l.b16 %v476
        %v679 = vunpack.c.h.b16 %v476
        %v680 = vunpack.c.l.b16 %v477
        %v681 = vunpack.c.h.b16 %v477
        %v682 = vunpack.c.l.b16 %v478
        %v683 = vunpack.c.h.b16 %v478
        %v684 = vunpack.c.l.b16 %v479
        %v685 = vunpack.c.h.b16 %v479
        %v686 = vunpack.c.l.b16 %v480
        %v687 = vunpack.c.h.b16 %v480
        %v688 = vunpack.c.l.b16 %v481
        %v689 = vunpack.c.h.b16 %v481
        %v690 = vunpack.c.l.b16 %v482
        %v691 = vunpack.c.h.b16 %v482
        %v692 = vunpack.c.l.b16 %v483
        %v693 = vunpack.c.h.b16 %v483
        %v694 = vunpack.c.l.b16 %v484
        %v695 = vunpack.c.h.b16 %v484
        %v696 = vunpack.c.l.b16 %v485
        %v697 = vunpack.c.h.b16 %v485
        %v698 = vunpack.c.l.b16 %v486
        %v699 = vunpack.c.h.b16 %v486
        %v700 = vunpack.c.l.b16 %v487
        %v701 = vunpack.c.h.b16 %v487
        %v702 = vunpack.c.l.b16 %v488
        %v703 = vunpack.c.h.b16 %v488
        %v704 = vunpack.c.l.b16 %v489
        %v705 = vunpack.c.h.b16 %v489
        %v706 = vunpack.c.l.b16 %v490
        %v707 = vunpack.c.h.b16 %v490
        %v708 = vunpack.c.l.b16 %v491
        %v709 = vunpack.c.h.b16 %v491
        %v710 = vunpack.c.l.b16 %v492
        %v711 = vunpack.c.h.b16 %v492
        %v712 = vunpack.c.l.b16 %v493
        %v713 = vunpack.c.h.b16 %v493
        %v714 = vunpack.c.l.b16 %v494
        %v715 = vunpack.c.h.b16 %v494
        %v716 = vunpack.c.l.b16 %v495
        %v717 = vunpack.c.h.b16 %v495
        %v718 = vunpack.c.l.b16 %v496
        %v719 = vunpack.c.h.b16 %v496
        %v720 = vunpack.c.l.b16 %v497
        %v721 = vunpack.c.h.b16 %v497
        %v722 = vpack.c.b16 %v596, %v594
        %v723 = vpack.c.b16 %v597, %v595
        %v724 = vpack.c.b16 %v600, %v598
        %v725 = vpack.c.b16 %v601, %v599
        %v726 = vpack.c.b16 %v604, %v602
        %v727 = vpack.c.b16 %v605, %v603
        %v728 = vpack.c.b16 %v608, %v606
        %v729 = vpack.c.b16 %v609, %v607
        %v730 = vpack.c.b16 %v612, %v610
        %v731 = vpack.c.b16 %v613, %v611
        %v732 = vpack.c.b16 %v616, %v614
        %v733 = vpack.c.b16 %v617, %v615
        %v734 = vpack.c.b16 %v620, %v618
        %v735 = vpack.c.b16 %v621, %v619
        %v736 = vpack.c.b16 %v624, %v622
        %v737 = vpack.c.b16 %v625, %v623
        %v738 = vpack.c.b16 %v628, %v626
        %v739 = vpack.c.b16 %v629, %v627
        %v740 = vpack.c.b16 %v632, %v630
        %v741 = vpack.c.b16 %v633, %v631
        %v742 = vpack.c.b16 %v636, %v634
        %v743 = vpack.c.b16 %v637, %v635
        %v744 = vpack.c.b16 %v640, %v638
        %v745 = vpack.c.b16 %v641, %v639
        %v746 = vpack.c.b16 %v644, %v642
        %v747 = vpack.c.b16 %v645, %v643
        %v748 = vpack.c.b16 %v648, %v646
        %v749 = vpack.c.b16 %v649, %v647
        %v750 = vpack.c.b16 %v652, %v650
        %v751 = vpack.c.b16 %v653, %v651
        %v752 = vpack.c.b16 %v656, %v654
        %v753 = vpack.c.b16 %v657, %v655
        %v754 = vpack.c.b16 %v660, %v658
        %v755 = vpack.c.b16 %v661, %v659
        %v756 = vpack.c.b16 %v664, %v662
        %v757 = vpack.c.b16 %v665, %v663
        %v758 = vpack.c.b16 %v668, %v666
        %v759 = vpack.c.b16 %v669, %v667
        %v760 = vpack.c.b16 %v672, %v670
        %v761 = vpack.c.b16 %v673, %v671
        %v762 = vpack.c.b16 %v676, %v674
        %v763 = vpack.c.b16 %v677, %v675
        %v764 = vpack.c.b16 %v680, %v678
        %v765 = vpack.c.b16 %v681, %v679
        %v766 = vpack.c.b16 %v684, %v682
        %v767 = vpack.c.b16 %v685, %v683
        %v768 = vpack.c.b16 %v688, %v686
        %v769 = vpack.c.b16 %v689, %v687
        %v770 = vpack.c.b16 %v692, %v690
        %v771 = vpack.c.b16 %v693, %v691
        %v772 = vpack.c.b16 %v696, %v694
        %v773 = vpack.c.b16 %v697, %v695
        %v774 = vpack.c.b16 %v700, %v698
        %v775 = vpack.c.b16 %v701, %v699
        %v776 = vpack.c.b16 %v704, %v702
        %v777 = vpack.c.b16 %v705, %v703
        %v778 = vpack.c.b16 %v708, %v706
        %v779 = vpack.c.b16 %v709, %v707
        %v780 = vpack.c.b16 %v712, %v710
        %v781 = vpack.c.b16 %v713, %v711
        %v782 = vpack.c.b16 %v716, %v714
        %v783 = vpack.c.b16 %v717, %v715
        %v784 = vpack.c.b16 %v720, %v718
        %v785 = vpack.c.b16 %v721, %v719
        %v882 = vunpack.c.l.b16 %v498
        %v883 = vunpack.c.l.b16 %v499
        %v884 = vunpack.c.l.b16 %v500
        %v885 = vunpack.c.l.b16 %v501
        %v886 = vunpack.c.l.b16 %v502
        %v887 = vunpack.c.l.b16 %v503
        %v888 = vunpack.c.l.b16 %v504
        %v889 = vunpack.c.l.b16 %v505
        %v890 = vunpack.c.l.b16 %v506
        %v891 = vunpack.c.l.b16 %v507
        %v892 = vunpack.c.l.b16 %v508
        %v893 = vunpack.c.l.b16 %v509
        %v894 = vunpack.c.l.b16 %v510
        %v895 = vunpack.c.l.b16 %v511
        %v896 = vunpack.c.l.b16 %v512
        %v897 = vunpack.c.l.b16 %v513
        %v898 = vunpack.c.l.b16 %v514
        %v899 = vunpack.c.l.b16 %v515
        %v900 = vunpack.c.l.b16 %v516
        %v901 = vunpack.c.l.b16 %v517
        %v902 = vunpack.c.l.b16 %v518
        %v903 = vunpack.c.l.b16 %v519
        %v904 = vunpack.c.l.b16 %v520
        %v905 = vunpack.c.l.b16 %v521
        %v906 = vunpack.c.l.b16 %v522
        %v907 = vunpack.c.l.b16 %v523
        %v908 = vunpack.c.l.b16 %v524
        %v909 = vunpack.c.l.b16 %v525
        %v910 = vunpack.c.l.b16 %v526
        %v911 = vunpack.c.l.b16 %v527
        %v912 = vunpack.c.l.b16 %v528
        %v913 = vunpack.c.l.b16 %v529
        %v914 = vpack.c.b16 %v883, %v882
        %v915 = vpack.c.b16 %v885, %v884
        %v916 = vpack.c.b16 %v887, %v886
        %v917 = vpack.c.b16 %v889, %v888
        %v918 = vpack.c.b16 %v891, %v890
        %v919 = vpack.c.b16 %v893, %v892
        %v920 = vpack.c.b16 %v895, %v894
        %v921 = vpack.c.b16 %v897, %v896
        %v922 = vpack.c.b16 %v899, %v898
        %v923 = vpack.c.b16 %v901, %v900
        %v924 = vpack.c.b16 %v903, %v902
        %v925 = vpack.c.b16 %v905, %v904
        %v926 = vpack.c.b16 %v907, %v906
        %v927 = vpack.c.b16 %v909, %v908
        %v928 = vpack.c.b16 %v911, %v910
        %v929 = vpack.c.b16 %v913, %v912
        %946 = vmatprep.subr.bf16.mxu0 0
        %947 = vmatpush1.bf16.msra.mxu0 %v914
        %948 = vmatprep.subr.bf16.mxu0 0
        %949 = vmatpush1.bf16.msra.mxu0 %v915
        %950 = vmatprep.subr.bf16.mxu0 0
        %951 = vmatpush1.bf16.msra.mxu0 %v916
        %952 = vmatprep.subr.bf16.mxu0 0
        %953 = vmatpush1.bf16.msra.mxu0 %v917
        %954 = vmatprep.subr.bf16.mxu0 0
        %955 = vmatpush1.bf16.msra.mxu0 %v918
        %956 = vmatprep.subr.bf16.mxu0 0
        %957 = vmatpush1.bf16.msra.mxu0 %v919
        %958 = vmatprep.subr.bf16.mxu0 0
        %959 = vmatpush1.bf16.msra.mxu0 %v920
        %960 = vmatprep.subr.bf16.mxu0 0
        %961 = vmatpush1.bf16.msra.mxu0 %v921
        %962 = vmatprep.subr.bf16.mxu0 0
        %963 = vmatpush1.bf16.msra.mxu0 %v922
        %964 = vmatprep.subr.bf16.mxu0 0
        %965 = vmatpush1.bf16.msra.mxu0 %v923
        %966 = vmatprep.subr.bf16.mxu0 0
        %967 = vmatpush1.bf16.msra.mxu0 %v924
        %968 = vmatprep.subr.bf16.mxu0 0
        %969 = vmatpush1.bf16.msra.mxu0 %v925
        %970 = vmatprep.subr.bf16.mxu0 0
        %971 = vmatpush1.bf16.msra.mxu0 %v926
        %972 = vmatprep.subr.bf16.mxu0 0
        %973 = vmatpush1.bf16.msra.mxu0 %v927
        %974 = vmatprep.subr.bf16.mxu0 0
        %975 = vmatpush1.bf16.msra.mxu0 %v928
        %976 = vmatprep.subr.bf16.mxu0 0
        %977 = vmatpush1.bf16.msra.mxu0 %v929
        %978 = vmatprep.mubr.bf16.mxu0 %v723
        %979 = vmatmul.mubr.bf16.gmra.mrb[0].mxu0 %v722
        %v980 = vpop.f32.mrb[0].mxu0
        %v981 = vadd.f32 0.0, %v980
        %v982 = vpop.f32.mrb[0].mxu0
        %v983 = vpop.f32.mrb[0].mxu0
        %v984 = vadd.f32 0.0, %v983
        %v985 = vpop.f32.mrb[0].mxu0
        %986 = vmatprep.mubr.bf16.mxu0 %v725
        %987 = vmatmul.mubr.bf16.gmra.mrb[0].mxu0 %v724
        %v988 = vpop.f32.mrb[0].mxu0
        %v989 = vadd.f32 0.0, %v988
        %v990 = vpop.f32.mrb[0].mxu0
        %v991 = vpop.f32.mrb[0].mxu0
        %v992 = vadd.f32 0.0, %v991
        %v993 = vpop.f32.mrb[0].mxu0
        %994 = vmatprep.mubr.bf16.mxu0 %v727
        %995 = vmatmul.mubr.bf16.gmra.mrb[0].mxu0 %v726
        %v996 = vpop.f32.mrb[0].mxu0
        %v997 = vadd.f32 0.0, %v996
        %v998 = vpop.f32.mrb[0].mxu0
        %v999 = vpop.f32.mrb[0].mxu0
        %v1000 = vadd.f32 0.0, %v999
        %v1001 = vpop.f32.mrb[0].mxu0
        %1002 = vmatprep.mubr.bf16.mxu0 %v729
        %1003 = vmatmul.mubr.bf16.gmra.mrb[0].mxu0 %v728
        %v1004 = vpop.f32.mrb[0].mxu0
        %v1005 = vadd.f32 0.0, %v1004
        %v1006 = vpop.f32.mrb[0].mxu0
        %v1007 = vpop.f32.mrb[0].mxu0
        %v1008 = vadd.f32 0.0, %v1007
        %v1009 = vpop.f32.mrb[0].mxu0
        %1010 = vmatprep.mubr.bf16.mxu0 %v731
        %1011 = vmatmul.mubr.bf16.gmra.mrb[0].mxu0 %v730
        %v1012 = vpop.f32.mrb[0].mxu0
        %v1013 = vadd.f32 0.0, %v1012
        %v1014 = vpop.f32.mrb[0].mxu0
        %v1015 = vpop.f32.mrb[0].mxu0
        %v1016 = vadd.f32 0.0, %v1015
        %v1017 = vpop.f32.mrb[0].mxu0
        %1018 = vmatprep.mubr.bf16.mxu0 %v733
        %1019 = vmatmul.mubr.bf16.gmra.mrb[0].mxu0 %v732
        %v1020 = vpop.f32.mrb[0].mxu0
        %v1021 = vadd.f32 0.0, %v1020
        %v1022 = vpop.f32.mrb[0].mxu0
        %v1023 = vpop.f32.mrb[0].mxu0
        %v1024 = vadd.f32 0.0, %v1023
        %v1025 = vpop.f32.mrb[0].mxu0
        %1026 = vmatprep.mubr.bf16.mxu0 %v735
        %1027 = vmatmul.mubr.bf16.gmra.mrb[0].mxu0 %v734
        %v1028 = vpop.f32.mrb[0].mxu0
        %v1029 = vadd.f32 0.0, %v1028
        %v1030 = vpop.f32.mrb[0].mxu0
        %v1031 = vpop.f32.mrb[0].mxu0
        %v1032 = vadd.f32 0.0, %v1031
        %v1033 = vpop.f32.mrb[0].mxu0
        %1034 = vmatprep.mubr.bf16.mxu0 %v737
        %1035 = vmatmul.mubr.bf16.gmra.mrb[0].mxu0 %v736
        %v1036 = vpop.f32.mrb[0].mxu0
        %v1037 = vadd.f32 0.0, %v1036
        %v1038 = vpop.f32.mrb[0].mxu0
        %v1039 = vpop.f32.mrb[0].mxu0
        %v1040 = vadd.f32 0.0, %v1039
        %v1041 = vpop.f32.mrb[0].mxu0
        %1042 = vmatprep.mubr.bf16.mxu0 %v739
        %1043 = vmatmul.mubr.bf16.gmra.mrb[0].mxu0 %v738
        %v1044 = vpop.f32.mrb[0].mxu0
        %v1045 = vadd.f32 0.0, %v1044
        %v1046 = vpop.f32.mrb[0].mxu0
        %v1047 = vpop.f32.mrb[0].mxu0
        %v1048 = vadd.f32 0.0, %v1047
        %v1049 = vpop.f32.mrb[0].mxu0
        %1050 = vmatprep.mubr.bf16.mxu0 %v741
        %1051 = vmatmul.mubr.bf16.gmra.mrb[0].mxu0 %v740
        %v1052 = vpop.f32.mrb[0].mxu0
        %v1053 = vadd.f32 0.0, %v1052
        %v1054 = vpop.f32.mrb[0].mxu0
        %v1055 = vpop.f32.mrb[0].mxu0
        %v1056 = vadd.f32 0.0, %v1055
        %v1057 = vpop.f32.mrb[0].mxu0
        %1058 = vmatprep.mubr.bf16.mxu0 %v743
        %1059 = vmatmul.mubr.bf16.gmra.mrb[0].mxu0 %v742
        %v1060 = vpop.f32.mrb[0].mxu0
        %v1061 = vadd.f32 0.0, %v1060
        %v1062 = vpop.f32.mrb[0].mxu0
        %v1063 = vpop.f32.mrb[0].mxu0
        %v1064 = vadd.f32 0.0, %v1063
        %v1065 = vpop.f32.mrb[0].mxu0
        %1066 = vmatprep.mubr.bf16.mxu0 %v745
        %1067 = vmatmul.mubr.bf16.gmra.mrb[0].mxu0 %v744
        %v1068 = vpop.f32.mrb[0].mxu0
        %v1069 = vadd.f32 0.0, %v1068
        %v1070 = vpop.f32.mrb[0].mxu0
        %v1071 = vpop.f32.mrb[0].mxu0
        %v1072 = vadd.f32 0.0, %v1071
        %v1073 = vpop.f32.mrb[0].mxu0
        %1074 = vmatprep.mubr.bf16.mxu0 %v747
        %1075 = vmatmul.mubr.bf16.gmra.mrb[0].mxu0 %v746
        %v1076 = vpop.f32.mrb[0].mxu0
        %v1077 = vadd.f32 0.0, %v1076
        %v1078 = vpop.f32.mrb[0].mxu0
        %v1079 = vpop.f32.mrb[0].mxu0
        %v1080 = vadd.f32 0.0, %v1079
        %v1081 = vpop.f32.mrb[0].mxu0
        %1082 = vmatprep.mubr.bf16.mxu0 %v749
        %1083 = vmatmul.mubr.bf16.gmra.mrb[0].mxu0 %v748
        %v1084 = vpop.f32.mrb[0].mxu0
        %v1085 = vadd.f32 0.0, %v1084
        %v1086 = vpop.f32.mrb[0].mxu0
        %v1087 = vpop.f32.mrb[0].mxu0
        %v1088 = vadd.f32 0.0, %v1087
        %v1089 = vpop.f32.mrb[0].mxu0
        %1090 = vmatprep.mubr.bf16.mxu0 %v751
        %1091 = vmatmul.mubr.bf16.gmra.mrb[0].mxu0 %v750
        %v1092 = vpop.f32.mrb[0].mxu0
        %v1093 = vadd.f32 0.0, %v1092
        %v1094 = vpop.f32.mrb[0].mxu0
        %v1095 = vpop.f32.mrb[0].mxu0
        %v1096 = vadd.f32 0.0, %v1095
        %v1097 = vpop.f32.mrb[0].mxu0
        %1098 = vmatprep.mubr.bf16.mxu0 %v753
        %1099 = vmatmul.mubr.bf16.gmra.mrb[0].mxu0 %v752
        %v1100 = vpop.f32.mrb[0].mxu0
        %v1101 = vadd.f32 0.0, %v1100
        %v1102 = vpop.f32.mrb[0].mxu0
        %v1103 = vpop.f32.mrb[0].mxu0
        %v1104 = vadd.f32 0.0, %v1103
        %v1105 = vpop.f32.mrb[0].mxu0
        %1106 = vmatprep.mubr.bf16.mxu0 %v755
        %1107 = vmatmul.mubr.bf16.gmra.mrb[0].mxu0 %v754
        %v1108 = vpop.f32.mrb[0].mxu0
        %v1109 = vadd.f32 0.0, %v1108
        %v1110 = vpop.f32.mrb[0].mxu0
        %v1111 = vpop.f32.mrb[0].mxu0
        %v1112 = vadd.f32 0.0, %v1111
        %v1113 = vpop.f32.mrb[0].mxu0
        %1114 = vmatprep.mubr.bf16.mxu0 %v757
        %1115 = vmatmul.mubr.bf16.gmra.mrb[0].mxu0 %v756
        %v1116 = vpop.f32.mrb[0].mxu0
        %v1117 = vadd.f32 0.0, %v1116
        %v1118 = vpop.f32.mrb[0].mxu0
        %v1119 = vpop.f32.mrb[0].mxu0
        %v1120 = vadd.f32 0.0, %v1119
        %v1121 = vpop.f32.mrb[0].mxu0
        %1122 = vmatprep.mubr.bf16.mxu0 %v759
        %1123 = vmatmul.mubr.bf16.gmra.mrb[0].mxu0 %v758
        %v1124 = vpop.f32.mrb[0].mxu0
        %v1125 = vadd.f32 0.0, %v1124
        %v1126 = vpop.f32.mrb[0].mxu0
        %v1127 = vpop.f32.mrb[0].mxu0
        %v1128 = vadd.f32 0.0, %v1127
        %v1129 = vpop.f32.mrb[0].mxu0
        %1130 = vmatprep.mubr.bf16.mxu0 %v761
        %1131 = vmatmul.mubr.bf16.gmra.mrb[0].mxu0 %v760
        %v1132 = vpop.f32.mrb[0].mxu0
        %v1133 = vadd.f32 0.0, %v1132
        %v1134 = vpop.f32.mrb[0].mxu0
        %v1135 = vpop.f32.mrb[0].mxu0
        %v1136 = vadd.f32 0.0, %v1135
        %v1137 = vpop.f32.mrb[0].mxu0
        %1138 = vmatprep.mubr.bf16.mxu0 %v763
        %1139 = vmatmul.mubr.bf16.gmra.mrb[0].mxu0 %v762
        %v1140 = vpop.f32.mrb[0].mxu0
        %v1141 = vadd.f32 0.0, %v1140
        %v1142 = vpop.f32.mrb[0].mxu0
        %v1143 = vpop.f32.mrb[0].mxu0
        %v1144 = vadd.f32 0.0, %v1143
        %v1145 = vpop.f32.mrb[0].mxu0
        %1146 = vmatprep.mubr.bf16.mxu0 %v765
        %1147 = vmatmul.mubr.bf16.gmra.mrb[0].mxu0 %v764
        %v1148 = vpop.f32.mrb[0].mxu0
        %v1149 = vadd.f32 0.0, %v1148
        %v1150 = vpop.f32.mrb[0].mxu0
        %v1151 = vpop.f32.mrb[0].mxu0
        %v1152 = vadd.f32 0.0, %v1151
        %v1153 = vpop.f32.mrb[0].mxu0
        %1154 = vmatprep.mubr.bf16.mxu0 %v767
        %1155 = vmatmul.mubr.bf16.gmra.mrb[0].mxu0 %v766
        %v1156 = vpop.f32.mrb[0].mxu0
        %v1157 = vadd.f32 0.0, %v1156
        %v1158 = vpop.f32.mrb[0].mxu0
        %v1159 = vpop.f32.mrb[0].mxu0
        %v1160 = vadd.f32 0.0, %v1159
        %v1161 = vpop.f32.mrb[0].mxu0
        %1162 = vmatprep.mubr.bf16.mxu0 %v769
        %1163 = vmatmul.mubr.bf16.gmra.mrb[0].mxu0 %v768
        %v1164 = vpop.f32.mrb[0].mxu0
        %v1165 = vadd.f32 0.0, %v1164
        %v1166 = vpop.f32.mrb[0].mxu0
        %v1167 = vpop.f32.mrb[0].mxu0
        %v1168 = vadd.f32 0.0, %v1167
        %v1169 = vpop.f32.mrb[0].mxu0
        %1170 = vmatprep.mubr.bf16.mxu0 %v771
        %1171 = vmatmul.mubr.bf16.gmra.mrb[0].mxu0 %v770
        %v1172 = vpop.f32.mrb[0].mxu0
        %v1173 = vadd.f32 0.0, %v1172
        %v1174 = vpop.f32.mrb[0].mxu0
        %v1175 = vpop.f32.mrb[0].mxu0
        %v1176 = vadd.f32 0.0, %v1175
        %v1177 = vpop.f32.mrb[0].mxu0
        %1178 = vmatprep.mubr.bf16.mxu0 %v773
        %1179 = vmatmul.mubr.bf16.gmra.mrb[0].mxu0 %v772
        %v1180 = vpop.f32.mrb[0].mxu0
        %v1181 = vadd.f32 0.0, %v1180
        %v1182 = vpop.f32.mrb[0].mxu0
        %v1183 = vpop.f32.mrb[0].mxu0
        %v1184 = vadd.f32 0.0, %v1183
        %v1185 = vpop.f32.mrb[0].mxu0
        %1186 = vmatprep.mubr.bf16.mxu0 %v775
        %1187 = vmatmul.mubr.bf16.gmra.mrb[0].mxu0 %v774
        %v1188 = vpop.f32.mrb[0].mxu0
        %v1189 = vadd.f32 0.0, %v1188
        %v1190 = vpop.f32.mrb[0].mxu0
        %v1191 = vpop.f32.mrb[0].mxu0
        %v1192 = vadd.f32 0.0, %v1191
        %v1193 = vpop.f32.mrb[0].mxu0
        %1194 = vmatprep.mubr.bf16.mxu0 %v777
        %1195 = vmatmul.mubr.bf16.gmra.mrb[0].mxu0 %v776
        %v1196 = vpop.f32.mrb[0].mxu0
        %v1197 = vadd.f32 0.0, %v1196
        %v1198 = vpop.f32.mrb[0].mxu0
        %v1199 = vpop.f32.mrb[0].mxu0
        %v1200 = vadd.f32 0.0, %v1199
        %v1201 = vpop.f32.mrb[0].mxu0
        %1202 = vmatprep.mubr.bf16.mxu0 %v779
        %1203 = vmatmul.mubr.bf16.gmra.mrb[0].mxu0 %v778
        %v1204 = vpop.f32.mrb[0].mxu0
        %v1205 = vadd.f32 0.0, %v1204
        %v1206 = vpop.f32.mrb[0].mxu0
        %v1207 = vpop.f32.mrb[0].mxu0
        %v1208 = vadd.f32 0.0, %v1207
        %v1209 = vpop.f32.mrb[0].mxu0
        %1210 = vmatprep.mubr.bf16.mxu0 %v781
        %1211 = vmatmul.mubr.bf16.gmra.mrb[0].mxu0 %v780
        %v1212 = vpop.f32.mrb[0].mxu0
        %v1213 = vadd.f32 0.0, %v1212
        %v1214 = vpop.f32.mrb[0].mxu0
        %v1215 = vpop.f32.mrb[0].mxu0
        %v1216 = vadd.f32 0.0, %v1215
        %v1217 = vpop.f32.mrb[0].mxu0
        %1218 = vmatprep.mubr.bf16.mxu0 %v783
        %1219 = vmatmul.mubr.bf16.gmra.mrb[0].mxu0 %v782
        %v1220 = vpop.f32.mrb[0].mxu0
        %v1221 = vadd.f32 0.0, %v1220
        %v1222 = vpop.f32.mrb[0].mxu0
        %v1223 = vpop.f32.mrb[0].mxu0
        %v1224 = vadd.f32 0.0, %v1223
        %v1225 = vpop.f32.mrb[0].mxu0
        %1226 = vmatprep.mubr.bf16.mxu0 %v785
        %1227 = vmatmul.mubr.bf16.gmra.mrb[0].mxu0 %v784
        %v1228 = vpop.f32.mrb[0].mxu0
        %v1229 = vadd.f32 0.0, %v1228
        %v1230 = vpop.f32.mrb[0].mxu0
        %v1231 = vpop.f32.mrb[0].mxu0
        %v1232 = vadd.f32 0.0, %v1231
        %v1233 = vpop.f32.mrb[0].mxu0
        %1234 = vdwg.mxu0
        %v1235 = vadd.f32 %v370, %v981
        %v1236 = vadd.f32 %v371, %v984
        %v1237 = vadd.f32 %v372, %v989
        %v1238 = vadd.f32 %v373, %v992
        %v1239 = vadd.f32 %v374, %v997
        %v1240 = vadd.f32 %v375, %v1000
        %v1241 = vadd.f32 %v376, %v1005
        %v1242 = vadd.f32 %v377, %v1008
        %v1243 = vadd.f32 %v378, %v1013
        %v1244 = vadd.f32 %v379, %v1016
        %v1245 = vadd.f32 %v380, %v1021
        %v1246 = vadd.f32 %v381, %v1024
        %v1247 = vadd.f32 %v382, %v1029
        %v1248 = vadd.f32 %v383, %v1032
        %v1249 = vadd.f32 %v384, %v1037
        %v1250 = vadd.f32 %v385, %v1040
        %v1251 = vadd.f32 %v386, %v1045
        %v1252 = vadd.f32 %v387, %v1048
        %v1253 = vadd.f32 %v388, %v1053
        %v1254 = vadd.f32 %v389, %v1056
        %v1255 = vadd.f32 %v390, %v1061
        %v1256 = vadd.f32 %v391, %v1064
        %v1257 = vadd.f32 %v392, %v1069
        %v1258 = vadd.f32 %v393, %v1072
        %v1259 = vadd.f32 %v394, %v1077
        %v1260 = vadd.f32 %v395, %v1080
        %v1261 = vadd.f32 %v396, %v1085
        %v1262 = vadd.f32 %v397, %v1088
        %v1263 = vadd.f32 %v398, %v1093
        %v1264 = vadd.f32 %v399, %v1096
        %v1265 = vadd.f32 %v400, %v1101
        %v1266 = vadd.f32 %v401, %v1104
        %v1267 = vadd.f32 %v402, %v1109
        %v1268 = vadd.f32 %v403, %v1112
        %v1269 = vadd.f32 %v404, %v1117
        %v1270 = vadd.f32 %v405, %v1120
        %v1271 = vadd.f32 %v406, %v1125
        %v1272 = vadd.f32 %v407, %v1128
        %v1273 = vadd.f32 %v408, %v1133
        %v1274 = vadd.f32 %v409, %v1136
        %v1275 = vadd.f32 %v410, %v1141
        %v1276 = vadd.f32 %v411, %v1144
        %v1277 = vadd.f32 %v412, %v1149
        %v1278 = vadd.f32 %v413, %v1152
        %v1279 = vadd.f32 %v414, %v1157
        %v1280 = vadd.f32 %v415, %v1160
        %v1281 = vadd.f32 %v416, %v1165
        %v1282 = vadd.f32 %v417, %v1168
        %v1283 = vadd.f32 %v418, %v1173
        %v1284 = vadd.f32 %v419, %v1176
        %v1285 = vadd.f32 %v420, %v1181
        %v1286 = vadd.f32 %v421, %v1184
        %v1287 = vadd.f32 %v422, %v1189
        %v1288 = vadd.f32 %v423, %v1192
        %v1289 = vadd.f32 %v424, %v1197
        %v1290 = vadd.f32 %v425, %v1200
        %v1291 = vadd.f32 %v426, %v1205
        %v1292 = vadd.f32 %v427, %v1208
        %v1293 = vadd.f32 %v428, %v1213
        %v1294 = vadd.f32 %v429, %v1216
        %v1295 = vadd.f32 %v430, %v1221
        %v1296 = vadd.f32 %v431, %v1224
        %v1297 = vadd.f32 %v432, %v1229
        %v1298 = vadd.f32 %v433, %v1232
        %vm1299 = vcmask 523264
        %1300 = vst.msk [vmem:[#allocation2] sm:$0xff] %vm1299, %v1235
        %1301 = vst.msk [vmem:[#allocation2 + $0x8] sm:$0xff] %vm1299, %v1236
        %1302 = vst.msk [vmem:[#allocation2 + $0x10] sm:$0xff] %vm1299, %v1237
        %1303 = vst.msk [vmem:[#allocation2 + $0x18] sm:$0xff] %vm1299, %v1238
        %1304 = vst.msk [vmem:[#allocation2 + $0x20] sm:$0xff] %vm1299, %v1239
        %1305 = vst.msk [vmem:[#allocation2 + $0x28] sm:$0xff] %vm1299, %v1240
        %1306 = vst.msk [vmem:[#allocation2 + $0x30] sm:$0xff] %vm1299, %v1241
        %1307 = vst.msk [vmem:[#allocation2 + $0x38] sm:$0xff] %vm1299, %v1242
        %1308 = vst.msk [vmem:[#allocation2 + $0x40] sm:$0xff] %vm1299, %v1243
        %1309 = vst.msk [vmem:[#allocation2 + $0x48] sm:$0xff] %vm1299, %v1244
        %1310 = vst.msk [vmem:[#allocation2 + $0x50] sm:$0xff] %vm1299, %v1245
        %1311 = vst.msk [vmem:[#allocation2 + $0x58] sm:$0xff] %vm1299, %v1246
        %1312 = vst.msk [vmem:[#allocation2 + $0x60] sm:$0xff] %vm1299, %v1247
        %1313 = vst.msk [vmem:[#allocation2 + $0x68] sm:$0xff] %vm1299, %v1248
        %1314 = vst.msk [vmem:[#allocation2 + $0x70] sm:$0xff] %vm1299, %v1249
        %1315 = vst.msk [vmem:[#allocation2 + $0x78] sm:$0xff] %vm1299, %v1250
        %1316 = vst.msk [vmem:[#allocation2 + $0x80] sm:$0xff] %vm1299, %v1251
        %1317 = vst.msk [vmem:[#allocation2 + $0x88] sm:$0xff] %vm1299, %v1252
        %1318 = vst.msk [vmem:[#allocation2 + $0x90] sm:$0xff] %vm1299, %v1253
        %1319 = vst.msk [vmem:[#allocation2 + $0x98] sm:$0xff] %vm1299, %v1254
        %1320 = vst.msk [vmem:[#allocation2 + $0xa0] sm:$0xff] %vm1299, %v1255
        %1321 = vst.msk [vmem:[#allocation2 + $0xa8] sm:$0xff] %vm1299, %v1256
        %1322 = vst.msk [vmem:[#allocation2 + $0xb0] sm:$0xff] %vm1299, %v1257
        %1323 = vst.msk [vmem:[#allocation2 + $0xb8] sm:$0xff] %vm1299, %v1258
        %1324 = vst.msk [vmem:[#allocation2 + $0xc0] sm:$0xff] %vm1299, %v1259
        %1325 = vst.msk [vmem:[#allocation2 + $0xc8] sm:$0xff] %vm1299, %v1260
        %1326 = vst.msk [vmem:[#allocation2 + $0xd0] sm:$0xff] %vm1299, %v1261
        %1327 = vst.msk [vmem:[#allocation2 + $0xd8] sm:$0xff] %vm1299, %v1262
        %1328 = vst.msk [vmem:[#allocation2 + $0xe0] sm:$0xff] %vm1299, %v1263
        %1329 = vst.msk [vmem:[#allocation2 + $0xe8] sm:$0xff] %vm1299, %v1264
        %1330 = vst.msk [vmem:[#allocation2 + $0xf0] sm:$0xff] %vm1299, %v1265
        %1331 = vst.msk [vmem:[#allocation2 + $0xf8] sm:$0xff] %vm1299, %v1266
        %1332 = vst.msk [vmem:[#allocation2 + $0x100] sm:$0xff] %vm1299, %v1267
        %1333 = vst.msk [vmem:[#allocation2 + $0x108] sm:$0xff] %vm1299, %v1268
        %1334 = vst.msk [vmem:[#allocation2 + $0x110] sm:$0xff] %vm1299, %v1269
        %1335 = vst.msk [vmem:[#allocation2 + $0x118] sm:$0xff] %vm1299, %v1270
        %1336 = vst.msk [vmem:[#allocation2 + $0x120] sm:$0xff] %vm1299, %v1271
        %1337 = vst.msk [vmem:[#allocation2 + $0x128] sm:$0xff] %vm1299, %v1272
        %1338 = vst.msk [vmem:[#allocation2 + $0x130] sm:$0xff] %vm1299, %v1273
        %1339 = vst.msk [vmem:[#allocation2 + $0x138] sm:$0xff] %vm1299, %v1274
        %1340 = vst.msk [vmem:[#allocation2 + $0x140] sm:$0xff] %vm1299, %v1275
        %1341 = vst.msk [vmem:[#allocation2 + $0x148] sm:$0xff] %vm1299, %v1276
        %1342 = vst.msk [vmem:[#allocation2 + $0x150] sm:$0xff] %vm1299, %v1277
        %1343 = vst.msk [vmem:[#allocation2 + $0x158] sm:$0xff] %vm1299, %v1278
        %1344 = vst.msk [vmem:[#allocation2 + $0x160] sm:$0xff] %vm1299, %v1279
        %1345 = vst.msk [vmem:[#allocation2 + $0x168] sm:$0xff] %vm1299, %v1280
        %1346 = vst.msk [vmem:[#allocation2 + $0x170] sm:$0xff] %vm1299, %v1281
        %1347 = vst.msk [vmem:[#allocation2 + $0x178] sm:$0xff] %vm1299, %v1282
        %1348 = vst.msk [vmem:[#allocation2 + $0x180] sm:$0xff] %vm1299, %v1283
        %1349 = vst.msk [vmem:[#allocation2 + $0x188] sm:$0xff] %vm1299, %v1284
        %1350 = vst.msk [vmem:[#allocation2 + $0x190] sm:$0xff] %vm1299, %v1285
        %1351 = vst.msk [vmem:[#allocation2 + $0x198] sm:$0xff] %vm1299, %v1286
        %1352 = vst.msk [vmem:[#allocation2 + $0x1a0] sm:$0xff] %vm1299, %v1287
        %1353 = vst.msk [vmem:[#allocation2 + $0x1a8] sm:$0xff] %vm1299, %v1288
        %1354 = vst.msk [vmem:[#allocation2 + $0x1b0] sm:$0xff] %vm1299, %v1289
        %1355 = vst.msk [vmem:[#allocation2 + $0x1b8] sm:$0xff] %vm1299, %v1290
        %1356 = vst.msk [vmem:[#allocation2 + $0x1c0] sm:$0xff] %vm1299, %v1291
        %1357 = vst.msk [vmem:[#allocation2 + $0x1c8] sm:$0xff] %vm1299, %v1292
        %1358 = vst.msk [vmem:[#allocation2 + $0x1d0] sm:$0xff] %vm1299, %v1293
        %1359 = vst.msk [vmem:[#allocation2 + $0x1d8] sm:$0xff] %vm1299, %v1294
        %1360 = vst.msk [vmem:[#allocation2 + $0x1e0] sm:$0xff] %vm1299, %v1295
        %1361 = vst.msk [vmem:[#allocation2 + $0x1e8] sm:$0xff] %vm1299, %v1296
        %1362 = vst.msk [vmem:[#allocation2 + $0x1f0] sm:$0xff] %vm1299, %v1297
        %1363 = vst.msk [vmem:[#allocation2 + $0x1f8] sm:$0xff] %vm1299, %v1298
        // Predicated region
        $region41: #{stem_conv.1} parent=35 // pred_check
          %p1364 = pneg %p301
        $region42: #{stem_conv.1} parent=35 // pred_check_branch
          %1366 = sbr.rel (%p1364) target = $region44
        $region43: #{stem_conv.1} parent=35 // pred_region
          %v1367 = vld [vmem:[#allocation2] sm:$0xff]
          %v1368 = vld [vmem:[#allocation2 + $0x8] sm:$0xff]
          %v1369 = vld [vmem:[#allocation2 + $0x10] sm:$0xff]
          %v1370 = vld [vmem:[#allocation2 + $0x18] sm:$0xff]
          %v1371 = vld [vmem:[#allocation2 + $0x20] sm:$0xff]
          %v1372 = vld [vmem:[#allocation2 + $0x28] sm:$0xff]
          %v1373 = vld [vmem:[#allocation2 + $0x30] sm:$0xff]
          %v1374 = vld [vmem:[#allocation2 + $0x38] sm:$0xff]
          %v1375 = vld [vmem:[#allocation2 + $0x40] sm:$0xff]
          %v1376 = vld [vmem:[#allocation2 + $0x48] sm:$0xff]
          %v1377 = vld [vmem:[#allocation2 + $0x50] sm:$0xff]
          %v1378 = vld [vmem:[#allocation2 + $0x58] sm:$0xff]
          %v1379 = vld [vmem:[#allocation2 + $0x60] sm:$0xff]
          %v1380 = vld [vmem:[#allocation2 + $0x68] sm:$0xff]
          %v1381 = vld [vmem:[#allocation2 + $0x70] sm:$0xff]
          %v1382 = vld [vmem:[#allocation2 + $0x78] sm:$0xff]
          %v1383 = vld [vmem:[#allocation2 + $0x80] sm:$0xff]
          %v1384 = vld [vmem:[#allocation2 + $0x88] sm:$0xff]
          %v1385 = vld [vmem:[#allocation2 + $0x90] sm:$0xff]
          %v1386 = vld [vmem:[#allocation2 + $0x98] sm:$0xff]
          %v1387 = vld [vmem:[#allocation2 + $0xa0] sm:$0xff]
          %v1388 = vld [vmem:[#allocation2 + $0xa8] sm:$0xff]
          %v1389 = vld [vmem:[#allocation2 + $0xb0] sm:$0xff]
          %v1390 = vld [vmem:[#allocation2 + $0xb8] sm:$0xff]
          %v1391 = vld [vmem:[#allocation2 + $0xc0] sm:$0xff]
          %v1392 = vld [vmem:[#allocation2 + $0xc8] sm:$0xff]
          %v1393 = vld [vmem:[#allocation2 + $0xd0] sm:$0xff]
          %v1394 = vld [vmem:[#allocation2 + $0xd8] sm:$0xff]
          %v1395 = vld [vmem:[#allocation2 + $0xe0] sm:$0xff]
          %v1396 = vld [vmem:[#allocation2 + $0xe8] sm:$0xff]
          %v1397 = vld [vmem:[#allocation2 + $0xf0] sm:$0xff]
          %v1398 = vld [vmem:[#allocation2 + $0xf8] sm:$0xff]
          %v1399 = vld [vmem:[#allocation2 + $0x100] sm:$0xff]
          %v1400 = vld [vmem:[#allocation2 + $0x108] sm:$0xff]
          %v1401 = vld [vmem:[#allocation2 + $0x110] sm:$0xff]
          %v1402 = vld [vmem:[#allocation2 + $0x118] sm:$0xff]
          %v1403 = vld [vmem:[#allocation2 + $0x120] sm:$0xff]
          %v1404 = vld [vmem:[#allocation2 + $0x128] sm:$0xff]
          %v1405 = vld [vmem:[#allocation2 + $0x130] sm:$0xff]
          %v1406 = vld [vmem:[#allocation2 + $0x138] sm:$0xff]
          %v1407 = vld [vmem:[#allocation2 + $0x140] sm:$0xff]
          %v1408 = vld [vmem:[#allocation2 + $0x148] sm:$0xff]
          %v1409 = vld [vmem:[#allocation2 + $0x150] sm:$0xff]
          %v1410 = vld [vmem:[#allocation2 + $0x158] sm:$0xff]
          %v1411 = vld [vmem:[#allocation2 + $0x160] sm:$0xff]
          %v1412 = vld [vmem:[#allocation2 + $0x168] sm:$0xff]
          %v1413 = vld [vmem:[#allocation2 + $0x170] sm:$0xff]
          %v1414 = vld [vmem:[#allocation2 + $0x178] sm:$0xff]
          %v1415 = vld [vmem:[#allocation2 + $0x180] sm:$0xff]
          %v1416 = vld [vmem:[#allocation2 + $0x188] sm:$0xff]
          %v1417 = vld [vmem:[#allocation2 + $0x190] sm:$0xff]
          %v1418 = vld [vmem:[#allocation2 + $0x198] sm:$0xff]
          %v1419 = vld [vmem:[#allocation2 + $0x1a0] sm:$0xff]
          %v1420 = vld [vmem:[#allocation2 + $0x1a8] sm:$0xff]
          %v1421 = vld [vmem:[#allocation2 + $0x1b0] sm:$0xff]
          %v1422 = vld [vmem:[#allocation2 + $0x1b8] sm:$0xff]
          %v1423 = vld [vmem:[#allocation2 + $0x1c0] sm:$0xff]
          %v1424 = vld [vmem:[#allocation2 + $0x1c8] sm:$0xff]
          %v1425 = vld [vmem:[#allocation2 + $0x1d0] sm:$0xff]
          %v1426 = vld [vmem:[#allocation2 + $0x1d8] sm:$0xff]
          %v1427 = vld [vmem:[#allocation2 + $0x1e0] sm:$0xff]
          %v1428 = vld [vmem:[#allocation2 + $0x1e8] sm:$0xff]
          %v1429 = vld [vmem:[#allocation2 + $0x1f0] sm:$0xff]
          %v1430 = vld [vmem:[#allocation2 + $0x1f8] sm:$0xff]
          %v1431 = vld [vmem:[%s295] sm:$0x1]
          %v1433 = vlaneseq
          %v1434 = vshrl.u32 %v1433, 7
          %v1435 = vsub.s32 0, %v1434
          %v1436 = vrot.slane %v1431, %v1435
          %v1438 = vmul.f32 %v1367, %v1436
          %v1439 = vmul.f32 %v1368, %v1436
          %v1440 = vmul.f32 %v1369, %v1436
          %v1441 = vmul.f32 %v1370, %v1436
          %v1442 = vmul.f32 %v1371, %v1436
          %v1443 = vmul.f32 %v1372, %v1436
          %v1444 = vmul.f32 %v1373, %v1436
          %v1445 = vmul.f32 %v1374, %v1436
          %v1446 = vmul.f32 %v1375, %v1436
          %v1447 = vmul.f32 %v1376, %v1436
          %v1448 = vmul.f32 %v1377, %v1436
          %v1449 = vmul.f32 %v1378, %v1436
          %v1450 = vmul.f32 %v1379, %v1436
          %v1451 = vmul.f32 %v1380, %v1436
          %v1452 = vmul.f32 %v1381, %v1436
          %v1453 = vmul.f32 %v1382, %v1436
          %v1454 = vmul.f32 %v1383, %v1436
          %v1455 = vmul.f32 %v1384, %v1436
          %v1456 = vmul.f32 %v1385, %v1436
          %v1457 = vmul.f32 %v1386, %v1436
          %v1458 = vmul.f32 %v1387, %v1436
          %v1459 = vmul.f32 %v1388, %v1436
          %v1460 = vmul.f32 %v1389, %v1436
          %v1461 = vmul.f32 %v1390, %v1436
          %v1462 = vmul.f32 %v1391, %v1436
          %v1463 = vmul.f32 %v1392, %v1436
          %v1464 = vmul.f32 %v1393, %v1436
          %v1465 = vmul.f32 %v1394, %v1436
          %v1466 = vmul.f32 %v1395, %v1436
          %v1467 = vmul.f32 %v1396, %v1436
          %v1468 = vmul.f32 %v1397, %v1436
          %v1469 = vmul.f32 %v1398, %v1436
          %v1470 = vmul.f32 %v1399, %v1436
          %v1471 = vmul.f32 %v1400, %v1436
          %v1472 = vmul.f32 %v1401, %v1436
          %v1473 = vmul.f32 %v1402, %v1436
          %v1474 = vmul.f32 %v1403, %v1436
          %v1475 = vmul.f32 %v1404, %v1436
          %v1476 = vmul.f32 %v1405, %v1436
          %v1477 = vmul.f32 %v1406, %v1436
          %v1478 = vmul.f32 %v1407, %v1436
          %v1479 = vmul.f32 %v1408, %v1436
          %v1480 = vmul.f32 %v1409, %v1436
          %v1481 = vmul.f32 %v1410, %v1436
          %v1482 = vmul.f32 %v1411, %v1436
          %v1483 = vmul.f32 %v1412, %v1436
          %v1484 = vmul.f32 %v1413, %v1436
          %v1485 = vmul.f32 %v1414, %v1436
          %v1486 = vmul.f32 %v1415, %v1436
          %v1487 = vmul.f32 %v1416, %v1436
          %v1488 = vmul.f32 %v1417, %v1436
          %v1489 = vmul.f32 %v1418, %v1436
          %v1490 = vmul.f32 %v1419, %v1436
          %v1491 = vmul.f32 %v1420, %v1436
          %v1492 = vmul.f32 %v1421, %v1436
          %v1493 = vmul.f32 %v1422, %v1436
          %v1494 = vmul.f32 %v1423, %v1436
          %v1495 = vmul.f32 %v1424, %v1436
          %v1496 = vmul.f32 %v1425, %v1436
          %v1497 = vmul.f32 %v1426, %v1436
          %v1498 = vmul.f32 %v1427, %v1436
          %v1499 = vmul.f32 %v1428, %v1436
          %v1500 = vmul.f32 %v1429, %v1436
          %v1501 = vmul.f32 %v1430, %v1436
          %v1502 = vld [vmem:[%s298] sm:$0x1]
          %v1504 = vlaneseq
          %v1505 = vshrl.u32 %v1504, 7
          %v1506 = vsub.s32 0, %v1505
          %v1507 = vrot.slane %v1502, %v1506
          %v1509 = vadd.f32 %v1438, %v1507
          %v1510 = vadd.f32 %v1439, %v1507
          %v1511 = vadd.f32 %v1440, %v1507
          %v1512 = vadd.f32 %v1441, %v1507
          %v1513 = vadd.f32 %v1442, %v1507
          %v1514 = vadd.f32 %v1443, %v1507
          %v1515 = vadd.f32 %v1444, %v1507
          %v1516 = vadd.f32 %v1445, %v1507
          %v1517 = vadd.f32 %v1446, %v1507
          %v1518 = vadd.f32 %v1447, %v1507
          %v1519 = vadd.f32 %v1448, %v1507
          %v1520 = vadd.f32 %v1449, %v1507
          %v1521 = vadd.f32 %v1450, %v1507
          %v1522 = vadd.f32 %v1451, %v1507
          %v1523 = vadd.f32 %v1452, %v1507
          %v1524 = vadd.f32 %v1453, %v1507
          %v1525 = vadd.f32 %v1454, %v1507
          %v1526 = vadd.f32 %v1455, %v1507
          %v1527 = vadd.f32 %v1456, %v1507
          %v1528 = vadd.f32 %v1457, %v1507
          %v1529 = vadd.f32 %v1458, %v1507
          %v1530 = vadd.f32 %v1459, %v1507
          %v1531 = vadd.f32 %v1460, %v1507
          %v1532 = vadd.f32 %v1461, %v1507
          %v1533 = vadd.f32 %v1462, %v1507
          %v1534 = vadd.f32 %v1463, %v1507
          %v1535 = vadd.f32 %v1464, %v1507
          %v1536 = vadd.f32 %v1465, %v1507
          %v1537 = vadd.f32 %v1466, %v1507
          %v1538 = vadd.f32 %v1467, %v1507
          %v1539 = vadd.f32 %v1468, %v1507
          %v1540 = vadd.f32 %v1469, %v1507
          %v1541 = vadd.f32 %v1470, %v1507
          %v1542 = vadd.f32 %v1471, %v1507
          %v1543 = vadd.f32 %v1472, %v1507
          %v1544 = vadd.f32 %v1473, %v1507
          %v1545 = vadd.f32 %v1474, %v1507
          %v1546 = vadd.f32 %v1475, %v1507
          %v1547 = vadd.f32 %v1476, %v1507
          %v1548 = vadd.f32 %v1477, %v1507
          %v1549 = vadd.f32 %v1478, %v1507
          %v1550 = vadd.f32 %v1479, %v1507
          %v1551 = vadd.f32 %v1480, %v1507
          %v1552 = vadd.f32 %v1481, %v1507
          %v1553 = vadd.f32 %v1482, %v1507
          %v1554 = vadd.f32 %v1483, %v1507
          %v1555 = vadd.f32 %v1484, %v1507
          %v1556 = vadd.f32 %v1485, %v1507
          %v1557 = vadd.f32 %v1486, %v1507
          %v1558 = vadd.f32 %v1487, %v1507
          %v1559 = vadd.f32 %v1488, %v1507
          %v1560 = vadd.f32 %v1489, %v1507
          %v1561 = vadd.f32 %v1490, %v1507
          %v1562 = vadd.f32 %v1491, %v1507
          %v1563 = vadd.f32 %v1492, %v1507
          %v1564 = vadd.f32 %v1493, %v1507
          %v1565 = vadd.f32 %v1494, %v1507
          %v1566 = vadd.f32 %v1495, %v1507
          %v1567 = vadd.f32 %v1496, %v1507
          %v1568 = vadd.f32 %v1497, %v1507
          %v1569 = vadd.f32 %v1498, %v1507
          %v1570 = vadd.f32 %v1499, %v1507
          %v1571 = vadd.f32 %v1500, %v1507
          %v1572 = vadd.f32 %v1501, %v1507
          %v1573 = vmax.f32 %v1509, 0.0
          %v1574 = vmax.f32 %v1510, 0.0
          %v1575 = vmax.f32 %v1511, 0.0
          %v1576 = vmax.f32 %v1512, 0.0
          %v1577 = vmax.f32 %v1513, 0.0
          %v1578 = vmax.f32 %v1514, 0.0
          %v1579 = vmax.f32 %v1515, 0.0
          %v1580 = vmax.f32 %v1516, 0.0
          %v1581 = vmax.f32 %v1517, 0.0
          %v1582 = vmax.f32 %v1518, 0.0
          %v1583 = vmax.f32 %v1519, 0.0
          %v1584 = vmax.f32 %v1520, 0.0
          %v1585 = vmax.f32 %v1521, 0.0
          %v1586 = vmax.f32 %v1522, 0.0
          %v1587 = vmax.f32 %v1523, 0.0
          %v1588 = vmax.f32 %v1524, 0.0
          %v1589 = vmax.f32 %v1525, 0.0
          %v1590 = vmax.f32 %v1526, 0.0
          %v1591 = vmax.f32 %v1527, 0.0
          %v1592 = vmax.f32 %v1528, 0.0
          %v1593 = vmax.f32 %v1529, 0.0
          %v1594 = vmax.f32 %v1530, 0.0
          %v1595 = vmax.f32 %v1531, 0.0
          %v1596 = vmax.f32 %v1532, 0.0
          %v1597 = vmax.f32 %v1533, 0.0
          %v1598 = vmax.f32 %v1534, 0.0
          %v1599 = vmax.f32 %v1535, 0.0
          %v1600 = vmax.f32 %v1536, 0.0
          %v1601 = vmax.f32 %v1537, 0.0
          %v1602 = vmax.f32 %v1538, 0.0
          %v1603 = vmax.f32 %v1539, 0.0
          %v1604 = vmax.f32 %v1540, 0.0
          %v1605 = vmax.f32 %v1541, 0.0
          %v1606 = vmax.f32 %v1542, 0.0
          %v1607 = vmax.f32 %v1543, 0.0
          %v1608 = vmax.f32 %v1544, 0.0
          %v1609 = vmax.f32 %v1545, 0.0
          %v1610 = vmax.f32 %v1546, 0.0
          %v1611 = vmax.f32 %v1547, 0.0
          %v1612 = vmax.f32 %v1548, 0.0
          %v1613 = vmax.f32 %v1549, 0.0
          %v1614 = vmax.f32 %v1550, 0.0
          %v1615 = vmax.f32 %v1551, 0.0
          %v1616 = vmax.f32 %v1552, 0.0
          %v1617 = vmax.f32 %v1553, 0.0
          %v1618 = vmax.f32 %v1554, 0.0
          %v1619 = vmax.f32 %v1555, 0.0
          %v1620 = vmax.f32 %v1556, 0.0
          %v1621 = vmax.f32 %v1557, 0.0
          %v1622 = vmax.f32 %v1558, 0.0
          %v1623 = vmax.f32 %v1559, 0.0
          %v1624 = vmax.f32 %v1560, 0.0
          %v1625 = vmax.f32 %v1561, 0.0
          %v1626 = vmax.f32 %v1562, 0.0
          %v1627 = vmax.f32 %v1563, 0.0
          %v1628 = vmax.f32 %v1564, 0.0
          %v1629 = vmax.f32 %v1565, 0.0
          %v1630 = vmax.f32 %v1566, 0.0
          %v1631 = vmax.f32 %v1567, 0.0
          %v1632 = vmax.f32 %v1568, 0.0
          %v1633 = vmax.f32 %v1569, 0.0
          %v1634 = vmax.f32 %v1570, 0.0
          %v1635 = vmax.f32 %v1571, 0.0
          %v1636 = vmax.f32 %v1572, 0.0
          %v1637 = vpack.c.bf16 %v1574, %v1573
          %v1638 = vpack.c.bf16 %v1576, %v1575
          %v1639 = vpack.c.bf16 %v1578, %v1577
          %v1640 = vpack.c.bf16 %v1580, %v1579
          %v1641 = vpack.c.bf16 %v1582, %v1581
          %v1642 = vpack.c.bf16 %v1584, %v1583
          %v1643 = vpack.c.bf16 %v1586, %v1585
          %v1644 = vpack.c.bf16 %v1588, %v1587
          %v1645 = vpack.c.bf16 %v1590, %v1589
          %v1646 = vpack.c.bf16 %v1592, %v1591
          %v1647 = vpack.c.bf16 %v1594, %v1593
          %v1648 = vpack.c.bf16 %v1596, %v1595
          %v1649 = vpack.c.bf16 %v1598, %v1597
          %v1650 = vpack.c.bf16 %v1600, %v1599
          %v1651 = vpack.c.bf16 %v1602, %v1601
          %v1652 = vpack.c.bf16 %v1604, %v1603
          %v1653 = vpack.c.bf16 %v1606, %v1605
          %v1654 = vpack.c.bf16 %v1608, %v1607
          %v1655 = vpack.c.bf16 %v1610, %v1609
          %v1656 = vpack.c.bf16 %v1612, %v1611
          %v1657 = vpack.c.bf16 %v1614, %v1613
          %v1658 = vpack.c.bf16 %v1616, %v1615
          %v1659 = vpack.c.bf16 %v1618, %v1617
          %v1660 = vpack.c.bf16 %v1620, %v1619
          %v1661 = vpack.c.bf16 %v1622, %v1621
          %v1662 = vpack.c.bf16 %v1624, %v1623
          %v1663 = vpack.c.bf16 %v1626, %v1625
          %v1664 = vpack.c.bf16 %v1628, %v1627
          %v1665 = vpack.c.bf16 %v1630, %v1629
          %v1666 = vpack.c.bf16 %v1632, %v1631
          %v1667 = vpack.c.bf16 %v1634, %v1633
          %v1668 = vpack.c.bf16 %v1636, %v1635
          %v1701 = vunpack.c.l.b16 %v1637
          %v1702 = vunpack.c.h.b16 %v1637
          %v1703 = vunpack.c.l.b16 %v1638
          %v1704 = vunpack.c.h.b16 %v1638
          %v1705 = vunpack.c.l.b16 %v1639
          %v1706 = vunpack.c.h.b16 %v1639
          %v1707 = vunpack.c.l.b16 %v1640
          %v1708 = vunpack.c.h.b16 %v1640
          %v1709 = vunpack.c.l.b16 %v1641
          %v1710 = vunpack.c.h.b16 %v1641
          %v1711 = vunpack.c.l.b16 %v1642
          %v1712 = vunpack.c.h.b16 %v1642
          %v1713 = vunpack.c.l.b16 %v1643
          %v1714 = vunpack.c.h.b16 %v1643
          %v1715 = vunpack.c.l.b16 %v1644
          %v1716 = vunpack.c.h.b16 %v1644
          %v1717 = vunpack.c.l.b16 %v1645
          %v1718 = vunpack.c.h.b16 %v1645
          %v1719 = vunpack.c.l.b16 %v1646
          %v1720 = vunpack.c.h.b16 %v1646
          %v1721 = vunpack.c.l.b16 %v1647
          %v1722 = vunpack.c.h.b16 %v1647
          %v1723 = vunpack.c.l.b16 %v1648
          %v1724 = vunpack.c.h.b16 %v1648
          %v1725 = vunpack.c.l.b16 %v1649
          %v1726 = vunpack.c.h.b16 %v1649
          %v1727 = vunpack.c.l.b16 %v1650
          %v1728 = vunpack.c.h.b16 %v1650
          %v1729 = vunpack.c.l.b16 %v1651
          %v1730 = vunpack.c.h.b16 %v1651
          %v1731 = vunpack.c.l.b16 %v1652
          %v1732 = vunpack.c.h.b16 %v1652
          %v1733 = vunpack.c.l.b16 %v1653
          %v1734 = vunpack.c.h.b16 %v1653
          %v1735 = vunpack.c.l.b16 %v1654
          %v1736 = vunpack.c.h.b16 %v1654
          %v1737 = vunpack.c.l.b16 %v1655
          %v1738 = vunpack.c.h.b16 %v1655
          %v1739 = vunpack.c.l.b16 %v1656
          %v1740 = vunpack.c.h.b16 %v1656
          %v1741 = vunpack.c.l.b16 %v1657
          %v1742 = vunpack.c.h.b16 %v1657
          %v1743 = vunpack.c.l.b16 %v1658
          %v1744 = vunpack.c.h.b16 %v1658
          %v1745 = vunpack.c.l.b16 %v1659
          %v1746 = vunpack.c.h.b16 %v1659
          %v1747 = vunpack.c.l.b16 %v1660
          %v1748 = vunpack.c.h.b16 %v1660
          %v1749 = vunpack.c.l.b16 %v1661
          %v1750 = vunpack.c.h.b16 %v1661
          %v1751 = vunpack.c.l.b16 %v1662
          %v1752 = vunpack.c.h.b16 %v1662
          %v1753 = vunpack.c.l.b16 %v1663
          %v1754 = vunpack.c.h.b16 %v1663
          %v1755 = vunpack.c.l.b16 %v1664
          %v1756 = vunpack.c.h.b16 %v1664
          %v1757 = vunpack.c.l.b16 %v1665
          %v1758 = vunpack.c.h.b16 %v1665
          %v1759 = vunpack.c.l.b16 %v1666
          %v1760 = vunpack.c.h.b16 %v1666
          %v1761 = vunpack.c.l.b16 %v1667
          %v1762 = vunpack.c.h.b16 %v1667
          %v1763 = vunpack.c.l.b16 %v1668
          %v1764 = vunpack.c.h.b16 %v1668
          %v1765 = vpack.c.b16 %v1701, %v1701
          %v1766 = vpack.c.b16 %v1702, %v1702
          %v1767 = vpack.c.b16 %v1703, %v1703
          %v1768 = vpack.c.b16 %v1704, %v1704
          %v1769 = vpack.c.b16 %v1705, %v1705
          %v1770 = vpack.c.b16 %v1706, %v1706
          %v1771 = vpack.c.b16 %v1707, %v1707
          %v1772 = vpack.c.b16 %v1708, %v1708
          %v1773 = vpack.c.b16 %v1709, %v1709
          %v1774 = vpack.c.b16 %v1710, %v1710
          %v1775 = vpack.c.b16 %v1711, %v1711
          %v1776 = vpack.c.b16 %v1712, %v1712
          %v1777 = vpack.c.b16 %v1713, %v1713
          %v1778 = vpack.c.b16 %v1714, %v1714
          %v1779 = vpack.c.b16 %v1715, %v1715
          %v1780 = vpack.c.b16 %v1716, %v1716
          %v1781 = vpack.c.b16 %v1717, %v1717
          %v1782 = vpack.c.b16 %v1718, %v1718
          %v1783 = vpack.c.b16 %v1719, %v1719
          %v1784 = vpack.c.b16 %v1720, %v1720
          %v1785 = vpack.c.b16 %v1721, %v1721
          %v1786 = vpack.c.b16 %v1722, %v1722
          %v1787 = vpack.c.b16 %v1723, %v1723
          %v1788 = vpack.c.b16 %v1724, %v1724
          %v1789 = vpack.c.b16 %v1725, %v1725
          %v1790 = vpack.c.b16 %v1726, %v1726
          %v1791 = vpack.c.b16 %v1727, %v1727
          %v1792 = vpack.c.b16 %v1728, %v1728
          %v1793 = vpack.c.b16 %v1729, %v1729
          %v1794 = vpack.c.b16 %v1730, %v1730
          %v1795 = vpack.c.b16 %v1731, %v1731
          %v1796 = vpack.c.b16 %v1732, %v1732
          %v1797 = vpack.c.b16 %v1733, %v1733
          %v1798 = vpack.c.b16 %v1734, %v1734
          %v1799 = vpack.c.b16 %v1735, %v1735
          %v1800 = vpack.c.b16 %v1736, %v1736
          %v1801 = vpack.c.b16 %v1737, %v1737
          %v1802 = vpack.c.b16 %v1738, %v1738
          %v1803 = vpack.c.b16 %v1739, %v1739
          %v1804 = vpack.c.b16 %v1740, %v1740
          %v1805 = vpack.c.b16 %v1741, %v1741
          %v1806 = vpack.c.b16 %v1742, %v1742
          %v1807 = vpack.c.b16 %v1743, %v1743
          %v1808 = vpack.c.b16 %v1744, %v1744
          %v1809 = vpack.c.b16 %v1745, %v1745
          %v1810 = vpack.c.b16 %v1746, %v1746
          %v1811 = vpack.c.b16 %v1747, %v1747
          %v1812 = vpack.c.b16 %v1748, %v1748
          %v1813 = vpack.c.b16 %v1749, %v1749
          %v1814 = vpack.c.b16 %v1750, %v1750
          %v1815 = vpack.c.b16 %v1751, %v1751
          %v1816 = vpack.c.b16 %v1752, %v1752
          %v1817 = vpack.c.b16 %v1753, %v1753
          %v1818 = vpack.c.b16 %v1754, %v1754
          %v1819 = vpack.c.b16 %v1755, %v1755
          %v1820 = vpack.c.b16 %v1756, %v1756
          %v1821 = vpack.c.b16 %v1757, %v1757
          %v1822 = vpack.c.b16 %v1758, %v1758
          %v1823 = vpack.c.b16 %v1759, %v1759
          %v1824 = vpack.c.b16 %v1760, %v1760
          %v1825 = vpack.c.b16 %v1761, %v1761
          %v1826 = vpack.c.b16 %v1762, %v1762
          %v1827 = vpack.c.b16 %v1763, %v1763
          %v1828 = vpack.c.b16 %v1764, %v1764
          %vm1893 = vcmask 519168
          %1894 = vst.msk [vmem:[%s271] sm:$0xf] %vm1893, %v1765
          %1895 = vst.msk [vmem:[%s271 + $0x4] sm:$0xf] %vm1893, %v1766
          %1896 = vst.msk [vmem:[%s271 + $0x8] sm:$0xf] %vm1893, %v1767
          %1897 = vst.msk [vmem:[%s271 + $0xc] sm:$0xf] %vm1893, %v1768
          %1898 = vst.msk [vmem:[%s271 + $0x10] sm:$0xf] %vm1893, %v1769
          %1899 = vst.msk [vmem:[%s271 + $0x14] sm:$0xf] %vm1893, %v1770
          %1900 = vst.msk [vmem:[%s271 + $0x18] sm:$0xf] %vm1893, %v1771
          %1901 = vst.msk [vmem:[%s271 + $0x1c] sm:$0xf] %vm1893, %v1772
          %1902 = vst.msk [vmem:[%s271 + $0x20] sm:$0xf] %vm1893, %v1773
          %1903 = vst.msk [vmem:[%s271 + $0x24] sm:$0xf] %vm1893, %v1774
          %1904 = vst.msk [vmem:[%s271 + $0x28] sm:$0xf] %vm1893, %v1775
          %1905 = vst.msk [vmem:[%s271 + $0x2c] sm:$0xf] %vm1893, %v1776
          %1906 = vst.msk [vmem:[%s271 + $0x30] sm:$0xf] %vm1893, %v1777
          %1907 = vst.msk [vmem:[%s271 + $0x34] sm:$0xf] %vm1893, %v1778
          %1908 = vst.msk [vmem:[%s271 + $0x38] sm:$0xf] %vm1893, %v1779
          %1909 = vst.msk [vmem:[%s271 + $0x3c] sm:$0xf] %vm1893, %v1780
          %1910 = vst.msk [vmem:[%s271 + $0x40] sm:$0xf] %vm1893, %v1781
          %1911 = vst.msk [vmem:[%s271 + $0x44] sm:$0xf] %vm1893, %v1782
          %1912 = vst.msk [vmem:[%s271 + $0x48] sm:$0xf] %vm1893, %v1783
          %1913 = vst.msk [vmem:[%s271 + $0x4c] sm:$0xf] %vm1893, %v1784
          %1914 = vst.msk [vmem:[%s271 + $0x50] sm:$0xf] %vm1893, %v1785
          %1915 = vst.msk [vmem:[%s271 + $0x54] sm:$0xf] %vm1893, %v1786
          %1916 = vst.msk [vmem:[%s271 + $0x58] sm:$0xf] %vm1893, %v1787
          %1917 = vst.msk [vmem:[%s271 + $0x5c] sm:$0xf] %vm1893, %v1788
          %1918 = vst.msk [vmem:[%s271 + $0x60] sm:$0xf] %vm1893, %v1789
          %1919 = vst.msk [vmem:[%s271 + $0x64] sm:$0xf] %vm1893, %v1790
          %1920 = vst.msk [vmem:[%s271 + $0x68] sm:$0xf] %vm1893, %v1791
          %1921 = vst.msk [vmem:[%s271 + $0x6c] sm:$0xf] %vm1893, %v1792
          %1922 = vst.msk [vmem:[%s271 + $0x70] sm:$0xf] %vm1893, %v1793
          %1923 = vst.msk [vmem:[%s271 + $0x74] sm:$0xf] %vm1893, %v1794
          %1924 = vst.msk [vmem:[%s271 + $0x78] sm:$0xf] %vm1893, %v1795
          %1925 = vst.msk [vmem:[%s271 + $0x7c] sm:$0xf] %vm1893, %v1796
          %1926 = vst.msk [vmem:[%s271 + $0x80] sm:$0xf] %vm1893, %v1797
          %1927 = vst.msk [vmem:[%s271 + $0x84] sm:$0xf] %vm1893, %v1798
          %1928 = vst.msk [vmem:[%s271 + $0x88] sm:$0xf] %vm1893, %v1799
          %1929 = vst.msk [vmem:[%s271 + $0x8c] sm:$0xf] %vm1893, %v1800
          %1930 = vst.msk [vmem:[%s271 + $0x90] sm:$0xf] %vm1893, %v1801
          %1931 = vst.msk [vmem:[%s271 + $0x94] sm:$0xf] %vm1893, %v1802
          %1932 = vst.msk [vmem:[%s271 + $0x98] sm:$0xf] %vm1893, %v1803
          %1933 = vst.msk [vmem:[%s271 + $0x9c] sm:$0xf] %vm1893, %v1804
          %1934 = vst.msk [vmem:[%s271 + $0xa0] sm:$0xf] %vm1893, %v1805
          %1935 = vst.msk [vmem:[%s271 + $0xa4] sm:$0xf] %vm1893, %v1806
          %1936 = vst.msk [vmem:[%s271 + $0xa8] sm:$0xf] %vm1893, %v1807
          %1937 = vst.msk [vmem:[%s271 + $0xac] sm:$0xf] %vm1893, %v1808
          %1938 = vst.msk [vmem:[%s271 + $0xb0] sm:$0xf] %vm1893, %v1809
          %1939 = vst.msk [vmem:[%s271 + $0xb4] sm:$0xf] %vm1893, %v1810
          %1940 = vst.msk [vmem:[%s271 + $0xb8] sm:$0xf] %vm1893, %v1811
          %1941 = vst.msk [vmem:[%s271 + $0xbc] sm:$0xf] %vm1893, %v1812
          %1942 = vst.msk [vmem:[%s271 + $0xc0] sm:$0xf] %vm1893, %v1813
          %1943 = vst.msk [vmem:[%s271 + $0xc4] sm:$0xf] %vm1893, %v1814
          %1944 = vst.msk [vmem:[%s271 + $0xc8] sm:$0xf] %vm1893, %v1815
          %1945 = vst.msk [vmem:[%s271 + $0xcc] sm:$0xf] %vm1893, %v1816
          %1946 = vst.msk [vmem:[%s271 + $0xd0] sm:$0xf] %vm1893, %v1817
          %1947 = vst.msk [vmem:[%s271 + $0xd4] sm:$0xf] %vm1893, %v1818
          %1948 = vst.msk [vmem:[%s271 + $0xd8] sm:$0xf] %vm1893, %v1819
          %1949 = vst.msk [vmem:[%s271 + $0xdc] sm:$0xf] %vm1893, %v1820
          %1950 = vst.msk [vmem:[%s271 + $0xe0] sm:$0xf] %vm1893, %v1821
          %1951 = vst.msk [vmem:[%s271 + $0xe4] sm:$0xf] %vm1893, %v1822
          %1952 = vst.msk [vmem:[%s271 + $0xe8] sm:$0xf] %vm1893, %v1823
          %1953 = vst.msk [vmem:[%s271 + $0xec] sm:$0xf] %vm1893, %v1824
          %1954 = vst.msk [vmem:[%s271 + $0xf0] sm:$0xf] %vm1893, %v1825
          %1955 = vst.msk [vmem:[%s271 + $0xf4] sm:$0xf] %vm1893, %v1826
          %1956 = vst.msk [vmem:[%s271 + $0xf8] sm:$0xf] %vm1893, %v1827
          %1957 = vst.msk [vmem:[%s271 + $0xfc] sm:$0xf] %vm1893, %v1828
        $region44: #{stem_conv.1} parent=35 // pred_fallthru
          _
        %s1958 = sand.u32 %s155, 1
        %s1959 = scalar_lea.sflag [#allocation4], %s1958
        %s1960 = sand.u32 %s155, 1
        %s1961 = smul.addr %s1960, 256
        %s1962 = scalar_lea.vmem [#allocation3], %s1961
        // Predicated region
        $region45: #{stem_conv.1} parent=35 // pred_check
          %p1963 = pneg %p165
        $region46: #{stem_conv.1} parent=35 // pred_check_branch
          %1965 = sbr.rel (%p1963) target = $region48
        $region47: #{stem_conv.1} parent=35 // pred_region
          %s1966 = smul.u32 64, %s23
          %s1968 = ssub.s32 4096, 4096
          %1969 = vsyncadd %s1959, %s1968
          %s1970 = sadd.s32 %s24, %s1966
          %s1971 = smul.addr %s1970, 64
          %s1972 = scalar_lea.hbm %s4, %s1971
          %s1973 = sshll.u32 %s1962, 4
          %s1974 = int_to_ptr.vmem [resolvable:$true] %s1973
          %1979 = dma.vmem_to_hbm [thread:$0]  %s1974, 4096, %s1972, %s1959, 64, 64, 4
        $region48: #{stem_conv.1} parent=35 // pred_fallthru
          _
      $region36: #{stem_conv.1} parent=5 // pred_fallthru
        _
      %p1980 = scmp.le.s32.totalorder 2, %s13
      // Predicated region
      $region49: #{stem_conv.1} parent=5 // pred_check
        %p1981 = pneg %p1980
      $region50: #{stem_conv.1} parent=5 // pred_check_branch
        %1983 = sbr.rel (%p1981) target = $region52
      $region51: #{stem_conv.1} parent=5 // pred_region
        %s1984 = ssub.s32 %s13, 2
        // Predicated region
        $region53: #{stem_conv.1} parent=51 // pred_check
          %p1985 = pneg %p171
        $region54: #{stem_conv.1} parent=51 // pred_check_branch
          %1987 = sbr.rel (%p1985) target = $region56
        $region55: #{stem_conv.1} parent=51 // pred_region
          %s1988 = sand.u32 %s156, 1
          %s1989 = scalar_lea.sflag [#allocation4], %s1988
          %s1990 = sand.u32 %s156, 1
          %s1991 = smul.addr %s1990, 256
          %s1992 = scalar_lea.vmem [#allocation3], %s1991
          %1993 = dma.done %s1989, 4096
        $region56: #{stem_conv.1} parent=51 // pred_fallthru
          _
      $region52: #{stem_conv.1} parent=5 // pred_fallthru
        _
    $region6: #{stem_conv.1} parent=1 // loop_footer
      %s17 = sadd.s32 1, %s13
    $region7: #{stem_conv.1} parent=1 // loop_footer_branch
      %12 = sbr.rel target = $region3
    $region8: #{stem_conv.1} parent=1 // loop_exit
      _
    %1994 = vsyncpa [#allocation4], 1
    %s1995 = scalar_lea.sflag [#allocation4], 1
    %1996 = vsyncpa %s1995, 1

</llo_original>
